<compile_context>
chip_gen: v5e
topology: v5e:2x2
jax: 0.10.0
libtpu: 0.0.40
codegen_flags: <defaults>
</compile_context>

<pallas_src>
import math
import functools

import jax
import jax.numpy as jnp
from jax.experimental import pallas as pl
from jax.experimental.pallas import tpu as pltpu


_GELU_C = math.sqrt(2.0 / math.pi)
_IMG_LEN = 37  # matches `output_h[:, -37:, :]` in the reference module


# ----------------------------------------------------------------------------
# small helpers
# ----------------------------------------------------------------------------

def _round_up(x, m):
    return (x + m - 1) // m * m


def _pick_tile_m(m, pref):
    """Row tile: multiple of 8, at most `pref`, never larger than needed."""
    return min(pref, _round_up(m, 8))


def _pick_tile_n(n, pref):
    """Lane tile: full width if small (block == array dim), else `pref` (mult of 128)
    with a ragged (masked) last tile via a cdiv grid."""
    return n if n <= pref else pref


def _vmem_limit(need_bytes):
    """Explicit scoped-VMEM limit: >= 32 MiB (v5e default is only 16 MiB), clamped
    below the physical VMEM of the current chip (64 MiB on v7x)."""
    try:
        cap = int(pltpu.get_tpu_info().vmem_capacity_bytes)
    except Exception:
        cap = 64 * 1024 * 1024
    return int(min(max(need_bytes * 5 // 4 + (4 << 20), 32 * 1024 * 1024),
                   cap - (8 << 20)))


def _gelu_new(h):
    # gelu_new (tanh approximation used by BERT's ACT2FN['gelu'])
    return 0.5 * h * (1.0 + jnp.tanh(_GELU_C * (h + 0.044715 * h * h * h)))


def _layer_norm(h, gamma, beta, eps):
    # two-pass LayerNorm (mean, then centered variance) -- matches torch.nn.LayerNorm
    inv_d = 1.0 / h.shape[-1]
    mean = jnp.sum(h, axis=-1, keepdims=True) * inv_d
    hc = h - mean
    var = jnp.sum(hc * hc, axis=-1, keepdims=True) * inv_d
    return hc * jax.lax.rsqrt(var + eps) * gamma + beta


def _transform_tile(x, w, b, gamma, beta, eps):
    """dense -> gelu_new -> LayerNorm on one row tile.  MXU fed in w.dtype (bf16),
    f32 accumulation; elementwise math in f32."""
    h = jnp.dot(x.astype(w.dtype), w, preferred_element_type=jnp.float32) + b
    return _layer_norm(_gelu_new(h), gamma, beta, eps)


# ----------------------------------------------------------------------------
# Kernel 1: fused lm chain
#   transform -> lm_transformer -> { lm_classifier (tiled over vocab),
#                                    pos_tag_transformer -> pos_tag_classifier }
# Grid = (B, lm row tiles, vocab tiles).  The heavy per-row work and the whole pos
# branch run once per row tile (j == 0); only the lm classifier dot runs per vocab
# tile, reading the bf16 lm_h scratch resident in VMEM.
# ----------------------------------------------------------------------------

def _lm_chain_kernel(x_ref, wt_ref, bt_ref, g_ref, be_ref,
                     wlt_ref, blt_ref, wpt_ref, bpt_ref,
                     wpc_ref, bpc_ref, wlc_ref, blc_ref,
                     lm_o_ref, pos_o_ref, lm_h_ref, *, eps):
    @pl.when(pl.program_id(2) == 0)
    def _():
        h = _transform_tile(x_ref[...], wt_ref[...], bt_ref[...],
                            g_ref[...], be_ref[...], eps)
        lm_h = jnp.dot(h.astype(wlt_ref.dtype), wlt_ref[...],
                       preferred_element_type=jnp.float32) + blt_ref[...]
        lm_h_bf = lm_h.astype(lm_h_ref.dtype)     # cast once; reused for every j
        lm_h_ref[...] = lm_h_bf
        pos_h = jnp.dot(lm_h_bf, wpt_ref[...],
                        preferred_element_type=jnp.float32) + bpt_ref[...]
        pos_o_ref[...] = (
            jnp.dot(pos_h.astype(wpc_ref.dtype), wpc_ref[...],
                    preferred_element_type=jnp.float32) + bpc_ref[...]
        ).astype(pos_o_ref.dtype)

    lm_o_ref[...] = (
        jnp.dot(lm_h_ref[...], wlc_ref[...], preferred_element_type=jnp.float32)
        + blc_ref[...]
    ).astype(lm_o_ref.dtype)


def lm_chain_pallas(output_h, p, eps, *, tm=512, tn=512):
    B, L, D = output_h.shape
    lm_len = L - _IMG_LEN

    wt, bt = p["transform_dense"]
    gamma, beta = p["ln_gamma"], p["ln_beta"]
    wlt, blt = p["lm_transformer"]
    wpt, bpt = p["pos_tag_transformer"]
    wpc, bpc = p["pos_tag_classifier"]
    wlc, blc = p["lm_classifier"]
    vocab = wlc.shape[1]
    pos_num = wpc.shape[1]

    tm = _pick_tile_m(lm_len, tm)
    tn = _pick_tile_n(vocab, tn)
    grid = (B, pl.cdiv(lm_len, tm), pl.cdiv(vocab, tn))

    wb = wt.dtype.itemsize
    need = (2 * tm * D * 4                                  # x tile (double-buffered)
            + (3 * D * D + D * pos_num) * wb                # resident weights (single-buf)
            + 2 * D * tn * wb + 2 * tn * 4                  # lm classifier tiles
            + 2 * tm * tn * 4 + 2 * tm * pos_num * 4        # output tiles
            + tm * D * wb                                   # lm_h scratch
            + (8 * D + 4 * pos_num) * 4)                    # biases / LN params

    idx0 = lambda b, i, j: (0, 0)
    resident_w = lambda shape: pl.BlockSpec(shape, idx0, pipeline_mode=pl.Buffered(1))

    lm_out, pos_out = pl.pallas_call(
        functools.partial(_lm_chain_kernel, eps=eps),
        out_shape=(jax.ShapeDtypeStruct((B, lm_len, vocab), jnp.float32),
                   jax.ShapeDtypeStruct((B, lm_len, pos_num), jnp.float32)),
        grid=grid,
        in_specs=[
            pl.BlockSpec((None, tm, D), lambda b, i, j: (b, i, 0)),  # raw hidden rows
            resident_w((D, D)),                                      # transform dense W
            pl.BlockSpec((1, D), idx0),                              # transform dense b
            pl.BlockSpec((1, D), idx0),                              # LN gamma
            pl.BlockSpec((1, D), idx0),                              # LN beta
            resident_w((D, D)),                                      # lm_transformer W
            pl.BlockSpec((1, D), idx0),
            resident_w((D, D)),                                      # pos_tag_transformer W
            pl.BlockSpec((1, D), idx0),
            pl.BlockSpec((D, pos_num), idx0),                        # pos_tag_classifier W
            pl.BlockSpec((1, pos_num), idx0),
            pl.BlockSpec((D, tn), lambda b, i, j: (0, j)),           # lm_classifier W (N-tiled)
            pl.BlockSpec((1, tn), lambda b, i, j: (0, j)),
        ],
        out_specs=[
            pl.BlockSpec((None, tm, tn), lambda b, i, j: (b, i, j)),
            pl.BlockSpec((None, tm, pos_num), lambda b, i, j: (b, i, 0)),
        ],
        scratch_shapes=[pltpu.VMEM((tm, D), wlc.dtype)],             # bf16 lm_h
        compiler_params=pltpu.CompilerParams(
            dimension_semantics=("parallel", "parallel", "arbitrary"),
            vmem_limit_bytes=_vmem_limit(need)),
    )(output_h, wt, bt, gamma, beta, wlt, blt, wpt, bpt, wpc, bpc, wlc, blc)
    return lm_out, pos_out


# ----------------------------------------------------------------------------
# Kernel 2: img head = transform (fused) + img_classifier, tiled (rows, labels)
# ----------------------------------------------------------------------------

def _img_kernel(x_ref, wt_ref, bt_ref, g_ref, be_ref, wc_ref, bc_ref,
                o_ref, h_ref, *, eps):
    @pl.when(pl.program_id(1) == 0)
    def _():
        h = _transform_tile(x_ref[...], wt_ref[...], bt_ref[...],
                            g_ref[...], be_ref[...], eps)
        h_ref[...] = h.astype(h_ref.dtype)

    o_ref[...] = (
        jnp.dot(h_ref[...], wc_ref[...], preferred_element_type=jnp.float32)
        + bc_ref[...]
    ).astype(o_ref.dtype)


def img_head_pallas(x2d, p, eps, *, tm=256, tn=512):
    M, D = x2d.shape
    wt, bt = p["transform_dense"]
    gamma, beta = p["ln_gamma"], p["ln_beta"]
    wc, bc = p["img_classifier"]
    n = wc.shape[1]

    tm = _pick_tile_m(M, tm)
    tn = _pick_tile_n(n, tn)
    grid = (pl.cdiv(M, tm), pl.cdiv(n, tn))

    wb = wt.dtype.itemsize
    need = (2 * tm * D * 4 + D * D * wb + 2 * D * tn * wb + 2 * tn * 4
            + 2 * tm * tn * 4 + tm * D * wb + 8 * D * 4)

    idx0 = lambda i, j: (0, 0)
    out = pl.pallas_call(
        functools.partial(_img_kernel, eps=eps),
        out_shape=jax.ShapeDtypeStruct((M, n), jnp.float32),
        grid=grid,
        in_specs=[
            pl.BlockSpec((tm, D), lambda i, j: (i, 0)),
            pl.BlockSpec((D, D), idx0, pipeline_mode=pl.Buffered(1)),
            pl.BlockSpec((1, D), idx0),
            pl.BlockSpec((1, D), idx0),
            pl.BlockSpec((1, D), idx0),
            pl.BlockSpec((D, tn), lambda i, j: (0, j)),
            pl.BlockSpec((1, tn), lambda i, j: (0, j)),
        ],
        out_specs=pl.BlockSpec((tm, tn), lambda i, j: (i, j)),
        scratch_shapes=[pltpu.VMEM((tm, D), wc.dtype)],
        compiler_params=pltpu.CompilerParams(
            dimension_semantics=("parallel", "arbitrary"),
            vmem_limit_bytes=_vmem_limit(need)),
    )(x2d, wt, bt, gamma, beta, wc, bc)
    return out


# ----------------------------------------------------------------------------
# Parameter construction + one-time preparation (outside the jitted forward)
# ----------------------------------------------------------------------------

def make_params(key, d_model, vocab_size, v_labels, pos_num):
    def lin(k, din, dout):
        kw, kb = jax.random.split(k)
        w = jax.random.normal(kw, (din, dout), jnp.float32) * 0.02
        b = jax.random.normal(kb, (1, dout), jnp.float32) * 0.02
        return w, b

    keys = jax.random.split(key, 8)
    params = {}
    params["transform_dense"] = lin(keys[0], d_model, d_model)
    params["ln_gamma"] = jnp.ones((1, d_model), jnp.float32)
    params["ln_beta"] = jnp.zeros((1, d_model), jnp.float32)
    params["lm_classifier"] = lin(keys[1], d_model, vocab_size)
    params["img_classifier"] = lin(keys[2], d_model, v_labels)
    params["nsp_classifier"] = lin(keys[3], d_model, 2)
    params["pos_tag_classifier"] = lin(keys[4], d_model, pos_num)
    params["lm_transformer"] = lin(keys[5], d_model, d_model)
    params["pos_tag_transformer"] = lin(keys[6], d_model, d_model)
    return params


def prepare_params(params, compute_dtype=jnp.bfloat16):
    """One-time prep (call OUTSIDE jit): cast matmul weights to the MXU compute dtype
    (bf16 -> 2-4x MXU rate on v6e/v7x, half the weight DMA); biases and LayerNorm
    params stay f32 since they are added to f32 accumulators."""
    def lin(name):
        w, b = params[name]
        return w.astype(compute_dtype), b.astype(jnp.float32)

    p = {name: lin(name) for name in
         ("transform_dense", "lm_classifier", "img_classifier",
          "pos_tag_classifier", "lm_transformer", "pos_tag_transformer")}
    p["nsp_classifier"] = (params["nsp_classifier"][0].astype(jnp.float32),
                           params["nsp_classifier"][1].astype(jnp.float32))
    p["ln_gamma"] = params["ln_gamma"].astype(jnp.float32)
    p["ln_beta"] = params["ln_beta"].astype(jnp.float32)
    return p


# ----------------------------------------------------------------------------
# Forward pass matching VDNetPredictionHead.forward
# ----------------------------------------------------------------------------

def vdnet_prediction_head(p, output_h, layer_norm_eps=1e-12):
    B, L, D = output_h.shape

    # lm branch: transform + lm/pos chain fully fused in one kernel, fed directly
    # from the raw hidden states (no transformed intermediate in HBM, no slicing).
    lm_output, pos_output = lm_chain_pallas(output_h, p, layer_norm_eps)

    # img branch: only the small (B, 37, D) window of the raw input is sliced;
    # transform is fused into the img kernel.
    img_hidden = output_h[:, -_IMG_LEN:, :].reshape(B * _IMG_LEN, D)
    v_labels = p["img_classifier"][0].shape[1]
    img_output = img_head_pallas(img_hidden, p, layer_norm_eps).reshape(B, _IMG_LEN, v_labels)

    # nsp branch: (B, D) -> (B, 2), tiny -> plain XLA (transform + linear).
    wt, bt = p["transform_dense"]
    nsp_h = _transform_tile(output_h[:, 0, :], wt, bt,
                            p["ln_gamma"], p["ln_beta"], layer_norm_eps)
    w_nsp, b_nsp = p["nsp_classifier"]
    nsp_output = jnp.dot(nsp_h, w_nsp, preferred_element_type=jnp.float32) + b_nsp[0]

    return img_output, lm_output, pos_output, nsp_output


# ----------------------------------------------------------------------------
# Pure-JAX (f32) reference for validation
# ----------------------------------------------------------------------------

def reference_forward(params, output_h, eps=1e-12):
    w, b = params["transform_dense"]
    h = jnp.dot(output_h, w) + b
    h = _gelu_new(h)
    h = _layer_norm(h, params["ln_gamma"], params["ln_beta"], eps)
    B, L, D = output_h.shape
    lm_len = L - _IMG_LEN
    img_h, nsp_h, lm_h0 = h[:, -_IMG_LEN:, :], h[:, 0, :], h[:, :lm_len, :]
    wlt, blt = params["lm_transformer"]
    lm_h = jnp.dot(lm_h0, wlt) + blt
    wpt, bpt = params["pos_tag_transformer"]
    pos_h = jnp.dot(lm_h, wpt) + bpt
    wlc, blc = params["lm_classifier"]
    wic, bic = params["img_classifier"]
    wnc, bnc = params["nsp_classifier"]
    wpc, bpc = params["pos_tag_classifier"]
    return (jnp.dot(img_h, wic) + bic,
            jnp.dot(lm_h, wlc) + blc,
            jnp.dot(pos_h, wpc) + bpc,
            jnp.dot(nsp_h, wnc) + bnc[0])


# ----------------------------------------------------------------------------
# Main
# ----------------------------------------------------------------------------

if __name__ == "__main__":
    # small config: d_model=32, vocab_size=64, v_labels=16, pos_num=8
    #               batch=2, seq length L=45 (lm part = L-37 = 8, img part = 37)
    B, L, D = 2, 45, 32
    VOCAB, V_LABELS, POS_NUM = 64, 16, 8

    key = jax.random.PRNGKey(0)
    k_params, k_input = jax.random.split(key)

    params_f32 = make_params(k_params, D, VOCAB, V_LABELS, POS_NUM)
    prepared = prepare_params(params_f32)          # one-time: bf16 weights, no per-call padding
    output_h = jax.random.normal(k_input, (B, L, D), jnp.float32)

    fwd = jax.jit(functools.partial(vdnet_prediction_head, layer_norm_eps=1e-12))
    img_out, lm_out, pos_out, nsp_out = fwd(prepared, output_h)
    jax.block_until_ready((img_out, lm_out, pos_out, nsp_out))

    assert img_out.shape == (B, _IMG_LEN, V_LABELS), img_out.shape
    assert lm_out.shape == (B, L - _IMG_LEN, VOCAB), lm_out.shape
    assert pos_out.shape == (B, L - _IMG_LEN, POS_NUM), pos_out.shape
    assert nsp_out.shape == (B, 2), nsp_out.shape
    assert all(bool(jnp.all(jnp.isfinite(o)))
               for o in (img_out, lm_out, pos_out, nsp_out))

    # loose-tolerance check vs. an all-f32 reference (kernels use bf16 MXU operands)
    refs = reference_forward(params_f32, output_h, eps=1e-12)
    for got, ref in zip((img_out, lm_out, pos_out, nsp_out), refs):
        err = float(jnp.max(jnp.abs(got - ref)))
        assert err < 5e-2, f"max abs error {err}"

    print("KERNEL_OK")
</pallas_src>

<mosaic_0001>
module attributes {stable_mosaic.version = 11 : i64} {
  func.func @_img_kernel(%arg0: i32, %arg1: i32, %arg2: memref<80x32xf32, #tpu.memory_space<vmem>>, %arg3: memref<32x32xbf16, #tpu.memory_space<vmem>>, %arg4: memref<1x32xf32, #tpu.memory_space<vmem>>, %arg5: memref<1x32xf32, #tpu.memory_space<vmem>>, %arg6: memref<1x32xf32, #tpu.memory_space<vmem>>, %arg7: memref<32x16xbf16, #tpu.memory_space<vmem>>, %arg8: memref<1x16xf32, #tpu.memory_space<vmem>>, %arg9: memref<80x16xf32, #tpu.memory_space<vmem>>, %arg10: memref<80x32xbf16, #tpu.memory_space<vmem>>) attributes {dimension_semantics = [#tpu.dimension_semantics<parallel>, #tpu.dimension_semantics<arbitrary>], iteration_bounds = array<i64: 1, 1>, scalar_prefetch = 0 : i64, scratch_operands = 1 : i64, tpu.core_type = #tpu.core_type<tc>, window_params = [{transform_indices = @transform_0, window_bounds = array<i64: 80, 32>}, {pipeline_mode = #tpu.pipeline_mode<synchronous>, transform_indices = @transform_1, window_bounds = array<i64: 32, 32>}, {pipeline_mode = #tpu.pipeline_mode<synchronous>, transform_indices = @transform_2, window_bounds = array<i64: 1, 32>}, {pipeline_mode = #tpu.pipeline_mode<synchronous>, transform_indices = @transform_3, window_bounds = array<i64: 1, 32>}, {pipeline_mode = #tpu.pipeline_mode<synchronous>, transform_indices = @transform_4, window_bounds = array<i64: 1, 32>}, {transform_indices = @transform_5, window_bounds = array<i64: 32, 16>}, {transform_indices = @transform_6, window_bounds = array<i64: 1, 16>}, {transform_indices = @transform_7, window_bounds = array<i64: 80, 16>}]} {
    %c0_i32 = arith.constant 0 : i32
    %0 = arith.cmpi eq, %arg1, %c0_i32 : i32
    %1 = arith.extui %0 : i1 to i32
    %c0_i32_0 = arith.constant 0 : i32
    %2 = arith.cmpi ne, %1, %c0_i32_0 : i32
    scf.if %2 {
      %c0_8 = arith.constant 0 : index
      %c0_9 = arith.constant 0 : index
      %10 = vector.load %arg2[%c0_8, %c0_9] : memref<80x32xf32, #tpu.memory_space<vmem>>, vector<80x32xf32>
      %c0_10 = arith.constant 0 : index
      %c0_11 = arith.constant 0 : index
      %11 = vector.load %arg3[%c0_10, %c0_11] : memref<32x32xbf16, #tpu.memory_space<vmem>>, vector<32x32xbf16>
      %c0_12 = arith.constant 0 : index
      %c0_13 = arith.constant 0 : index
      %12 = vector.load %arg4[%c0_12, %c0_13] : memref<1x32xf32, #tpu.memory_space<vmem>>, vector<1x32xf32>
      %c0_14 = arith.constant 0 : index
      %c0_15 = arith.constant 0 : index
      %13 = vector.load %arg5[%c0_14, %c0_15] : memref<1x32xf32, #tpu.memory_space<vmem>>, vector<1x32xf32>
      %c0_16 = arith.constant 0 : index
      %c0_17 = arith.constant 0 : index
      %14 = vector.load %arg6[%c0_16, %c0_17] : memref<1x32xf32, #tpu.memory_space<vmem>>, vector<1x32xf32>
      %15 = arith.truncf %10 : vector<80x32xf32> to vector<80x32xbf16>
      %cst_18 = arith.constant dense<0.000000e+00> : vector<80x32xf32>
      %16 = tpu.matmul %15, %11, %cst_18 {dimension_numbers = #tpu.dot_dimension_numbers<[1], [0], [0], [1], [0, 0, 1, 1], [], []>} : vector<80x32xbf16>, vector<32x32xbf16>, vector<80x32xf32> -> vector<80x32xf32>
      %17 = vector.broadcast %12 : vector<1x32xf32> to vector<80x32xf32>
      %18 = arith.addf %16, %17 : vector<80x32xf32>
      %cst_19 = arith.constant 5.000000e-01 : f32
      %19 = vector.broadcast %cst_19 : f32 to vector<80x32xf32>
      %20 = arith.mulf %19, %18 : vector<80x32xf32>
      %cst_20 = arith.constant 4.471500e-02 : f32
      %21 = vector.broadcast %cst_20 : f32 to vector<80x32xf32>
      %22 = arith.mulf %21, %18 : vector<80x32xf32>
      %23 = arith.mulf %22, %18 : vector<80x32xf32>
      %24 = arith.mulf %23, %18 : vector<80x32xf32>
      %25 = arith.addf %18, %24 : vector<80x32xf32>
      %cst_21 = arith.constant 0.797884583 : f32
      %26 = vector.broadcast %cst_21 : f32 to vector<80x32xf32>
      %27 = arith.mulf %26, %25 : vector<80x32xf32>
      %28 = math.tanh %27 : vector<80x32xf32>
      %cst_22 = arith.constant 1.000000e+00 : f32
      %29 = vector.broadcast %cst_22 : f32 to vector<80x32xf32>
      %30 = arith.addf %29, %28 : vector<80x32xf32>
      %31 = arith.mulf %20, %30 : vector<80x32xf32>
      %cst_23 = arith.constant dense<0.000000e+00> : vector<80xf32>
      %32 = vector.multi_reduction <add>, %31, %cst_23 [1] : vector<80x32xf32> to vector<80xf32>
      %33 = vector.shape_cast %32 : vector<80xf32> to vector<80x1xf32>
      %cst_24 = arith.constant 3.125000e-02 : f32
      %34 = vector.broadcast %cst_24 : f32 to vector<80x1xf32>
      %35 = arith.mulf %33, %34 : vector<80x1xf32>
      %36 = vector.broadcast %35 : vector<80x1xf32> to vector<80x32xf32>
      %37 = arith.subf %31, %36 : vector<80x32xf32>
      %38 = arith.mulf %37, %37 : vector<80x32xf32>
      %cst_25 = arith.constant dense<0.000000e+00> : vector<80xf32>
      %39 = vector.multi_reduction <add>, %38, %cst_25 [1] : vector<80x32xf32> to vector<80xf32>
      %40 = vector.shape_cast %39 : vector<80xf32> to vector<80x1xf32>
      %cst_26 = arith.constant 3.125000e-02 : f32
      %41 = vector.broadcast %cst_26 : f32 to vector<80x1xf32>
      %42 = arith.mulf %40, %41 : vector<80x1xf32>
      %cst_27 = arith.constant 9.99999996E-13 : f32
      %43 = vector.broadcast %cst_27 : f32 to vector<80x1xf32>
      %44 = arith.addf %42, %43 : vector<80x1xf32>
      %45 = math.rsqrt %44 : vector<80x1xf32>
      %46 = vector.broadcast %45 : vector<80x1xf32> to vector<80x32xf32>
      %47 = arith.mulf %37, %46 : vector<80x32xf32>
      %48 = vector.broadcast %13 : vector<1x32xf32> to vector<80x32xf32>
      %49 = arith.mulf %47, %48 : vector<80x32xf32>
      %50 = vector.broadcast %14 : vector<1x32xf32> to vector<80x32xf32>
      %51 = arith.addf %49, %50 : vector<80x32xf32>
      %52 = arith.truncf %51 : vector<80x32xf32> to vector<80x32xbf16>
      %c0_28 = arith.constant 0 : index
      %c0_29 = arith.constant 0 : index
      %53 = vector.load %arg10[%c0_28, %c0_29] : memref<80x32xbf16, #tpu.memory_space<vmem>>, vector<80x32xbf16>
      tpu.vector_store %arg10[%c0_28, %c0_29], %52 {strides = array<i32>} : memref<80x32xbf16, #tpu.memory_space<vmem>>, vector<80x32xbf16>,
    } else {
    }
    %c0 = arith.constant 0 : index
    %c0_1 = arith.constant 0 : index
    %3 = vector.load %arg10[%c0, %c0_1] : memref<80x32xbf16, #tpu.memory_space<vmem>>, vector<80x32xbf16>
    %c0_2 = arith.constant 0 : index
    %c0_3 = arith.constant 0 : index
    %4 = vector.load %arg7[%c0_2, %c0_3] : memref<32x16xbf16, #tpu.memory_space<vmem>>, vector<32x16xbf16>
    %cst = arith.constant dense<0.000000e+00> : vector<80x16xf32>
    %5 = tpu.matmul %3, %4, %cst {dimension_numbers = #tpu.dot_dimension_numbers<[1], [0], [0], [1], [0, 0, 1, 1], [], []>} : vector<80x32xbf16>, vector<32x16xbf16>, vector<80x16xf32> -> vector<80x16xf32>
    %c0_4 = arith.constant 0 : index
    %c0_5 = arith.constant 0 : index
    %6 = vector.load %arg8[%c0_4, %c0_5] : memref<1x16xf32, #tpu.memory_space<vmem>>, vector<1x16xf32>
    %7 = vector.broadcast %6 : vector<1x16xf32> to vector<80x16xf32>
    %8 = arith.addf %5, %7 : vector<80x16xf32>
    %c0_6 = arith.constant 0 : index
    %c0_7 = arith.constant 0 : index
    %9 = vector.load %arg9[%c0_6, %c0_7] : memref<80x16xf32, #tpu.memory_space<vmem>>, vector<80x16xf32>
    tpu.vector_store %arg9[%c0_6, %c0_7], %8 {strides = array<i32>} : memref<80x16xf32, #tpu.memory_space<vmem>>, vector<80x16xf32>,
    return
  }
  func.func @transform_0(%arg0: i32, %arg1: i32) -> (i32, i32) {
    %c0_i32 = arith.constant 0 : i32
    %c0_i32_0 = arith.constant 0 : i32
    return %arg0, %c0_i32 : i32, i32
  }
  func.func @transform_1(%arg0: i32, %arg1: i32) -> (i32, i32) {
    %c0_i32 = arith.constant 0 : i32
    %c0_i32_0 = arith.constant 0 : i32
    %c0_i32_1 = arith.constant 0 : i32
    return %c0_i32, %c0_i32_0 : i32, i32
  }
  func.func @transform_2(%arg0: i32, %arg1: i32) -> (i32, i32) {
    %c0_i32 = arith.constant 0 : i32
    %c0_i32_0 = arith.constant 0 : i32
    %c0_i32_1 = arith.constant 0 : i32
    return %c0_i32, %c0_i32_0 : i32, i32
  }
  func.func @transform_3(%arg0: i32, %arg1: i32) -> (i32, i32) {
    %c0_i32 = arith.constant 0 : i32
    %c0_i32_0 = arith.constant 0 : i32
    %c0_i32_1 = arith.constant 0 : i32
    return %c0_i32, %c0_i32_0 : i32, i32
  }
  func.func @transform_4(%arg0: i32, %arg1: i32) -> (i32, i32) {
    %c0_i32 = arith.constant 0 : i32
    %c0_i32_0 = arith.constant 0 : i32
    %c0_i32_1 = arith.constant 0 : i32
    return %c0_i32, %c0_i32_0 : i32, i32
  }
  func.func @transform_5(%arg0: i32, %arg1: i32) -> (i32, i32) {
    %c0_i32 = arith.constant 0 : i32
    %c0_i32_0 = arith.constant 0 : i32
    return %c0_i32, %arg1 : i32, i32
  }
  func.func @transform_6(%arg0: i32, %arg1: i32) -> (i32, i32) {
    %c0_i32 = arith.constant 0 : i32
    %c0_i32_0 = arith.constant 0 : i32
    return %c0_i32, %arg1 : i32, i32
  }
  func.func @transform_7(%arg0: i32, %arg1: i32) -> (i32, i32) {
    %c0_i32 = arith.constant 0 : i32
    return %arg0, %arg1 : i32, i32
  }
}

module attributes {stable_mosaic.version = 11 : i64} {
  func.func @_lm_chain_kernel(%arg0: i32, %arg1: i32, %arg2: i32, %arg3: memref<1x8x32xf32, #tpu.memory_space<vmem>>, %arg4: memref<32x32xbf16, #tpu.memory_space<vmem>>, %arg5: memref<1x32xf32, #tpu.memory_space<vmem>>, %arg6: memref<1x32xf32, #tpu.memory_space<vmem>>, %arg7: memref<1x32xf32, #tpu.memory_space<vmem>>, %arg8: memref<32x32xbf16, #tpu.memory_space<vmem>>, %arg9: memref<1x32xf32, #tpu.memory_space<vmem>>, %arg10: memref<32x32xbf16, #tpu.memory_space<vmem>>, %arg11: memref<1x32xf32, #tpu.memory_space<vmem>>, %arg12: memref<32x8xbf16, #tpu.memory_space<vmem>>, %arg13: memref<1x8xf32, #tpu.memory_space<vmem>>, %arg14: memref<32x64xbf16, #tpu.memory_space<vmem>>, %arg15: memref<1x64xf32, #tpu.memory_space<vmem>>, %arg16: memref<1x8x64xf32, #tpu.memory_space<vmem>>, %arg17: memref<1x8x8xf32, #tpu.memory_space<vmem>>, %arg18: memref<8x32xbf16, #tpu.memory_space<vmem>>) attributes {dimension_semantics = [#tpu.dimension_semantics<parallel>, #tpu.dimension_semantics<parallel>, #tpu.dimension_semantics<arbitrary>], iteration_bounds = array<i64: 2, 1, 1>, scalar_prefetch = 0 : i64, scratch_operands = 1 : i64, tpu.core_type = #tpu.core_type<tc>, window_params = [{transform_indices = @transform_0, window_bounds = array<i64: 1, 8, 32>}, {pipeline_mode = #tpu.pipeline_mode<synchronous>, transform_indices = @transform_1, window_bounds = array<i64: 32, 32>}, {pipeline_mode = #tpu.pipeline_mode<synchronous>, transform_indices = @transform_2, window_bounds = array<i64: 1, 32>}, {pipeline_mode = #tpu.pipeline_mode<synchronous>, transform_indices = @transform_3, window_bounds = array<i64: 1, 32>}, {pipeline_mode = #tpu.pipeline_mode<synchronous>, transform_indices = @transform_4, window_bounds = array<i64: 1, 32>}, {pipeline_mode = #tpu.pipeline_mode<synchronous>, transform_indices = @transform_5, window_bounds = array<i64: 32, 32>}, {pipeline_mode = #tpu.pipeline_mode<synchronous>, transform_indices = @transform_6, window_bounds = array<i64: 1, 32>}, {pipeline_mode = #tpu.pipeline_mode<synchronous>, transform_indices = @transform_7, window_bounds = array<i64: 32, 32>}, {pipeline_mode = #tpu.pipeline_mode<synchronous>, transform_indices = @transform_8, window_bounds = array<i64: 1, 32>}, {pipeline_mode = #tpu.pipeline_mode<synchronous>, transform_indices = @transform_9, window_bounds = array<i64: 32, 8>}, {pipeline_mode = #tpu.pipeline_mode<synchronous>, transform_indices = @transform_10, window_bounds = array<i64: 1, 8>}, {transform_indices = @transform_11, window_bounds = array<i64: 32, 64>}, {transform_indices = @transform_12, window_bounds = array<i64: 1, 64>}, {transform_indices = @transform_13, window_bounds = array<i64: 1, 8, 64>}, {transform_indices = @transform_14, window_bounds = array<i64: 1, 8, 8>}]} {
    %c0_i32 = arith.constant 0 : i32
    %0 = arith.cmpi eq, %arg2, %c0_i32 : i32
    %1 = arith.extui %0 : i1 to i32
    %c0_i32_0 = arith.constant 0 : i32
    %2 = arith.cmpi ne, %1, %c0_i32_0 : i32
    scf.if %2 {
      %c0_9 = arith.constant 0 : index
      %c0_10 = arith.constant 0 : index
      %c0_11 = arith.constant 0 : index
      %12 = vector.load %arg3[%c0_9, %c0_10, %c0_11] : memref<1x8x32xf32, #tpu.memory_space<vmem>>, vector<1x8x32xf32>
      %13 = vector.shape_cast %12 : vector<1x8x32xf32> to vector<8x32xf32>
      %c0_12 = arith.constant 0 : index
      %c0_13 = arith.constant 0 : index
      %14 = vector.load %arg4[%c0_12, %c0_13] : memref<32x32xbf16, #tpu.memory_space<vmem>>, vector<32x32xbf16>
      %c0_14 = arith.constant 0 : index
      %c0_15 = arith.constant 0 : index
      %15 = vector.load %arg5[%c0_14, %c0_15] : memref<1x32xf32, #tpu.memory_space<vmem>>, vector<1x32xf32>
      %c0_16 = arith.constant 0 : index
      %c0_17 = arith.constant 0 : index
      %16 = vector.load %arg6[%c0_16, %c0_17] : memref<1x32xf32, #tpu.memory_space<vmem>>, vector<1x32xf32>
      %c0_18 = arith.constant 0 : index
      %c0_19 = arith.constant 0 : index
      %17 = vector.load %arg7[%c0_18, %c0_19] : memref<1x32xf32, #tpu.memory_space<vmem>>, vector<1x32xf32>
      %18 = arith.truncf %13 : vector<8x32xf32> to vector<8x32xbf16>
      %cst_20 = arith.constant dense<0.000000e+00> : vector<8x32xf32>
      %19 = tpu.matmul %18, %14, %cst_20 {dimension_numbers = #tpu.dot_dimension_numbers<[1], [0], [0], [1], [0, 0, 1, 1], [], []>} : vector<8x32xbf16>, vector<32x32xbf16>, vector<8x32xf32> -> vector<8x32xf32>
      %20 = vector.broadcast %15 : vector<1x32xf32> to vector<8x32xf32>
      %21 = arith.addf %19, %20 : vector<8x32xf32>
      %cst_21 = arith.constant 5.000000e-01 : f32
      %22 = vector.broadcast %cst_21 : f32 to vector<8x32xf32>
      %23 = arith.mulf %22, %21 : vector<8x32xf32>
      %cst_22 = arith.constant 4.471500e-02 : f32
      %24 = vector.broadcast %cst_22 : f32 to vector<8x32xf32>
      %25 = arith.mulf %24, %21 : vector<8x32xf32>
      %26 = arith.mulf %25, %21 : vector<8x32xf32>
      %27 = arith.mulf %26, %21 : vector<8x32xf32>
      %28 = arith.addf %21, %27 : vector<8x32xf32>
      %cst_23 = arith.constant 0.797884583 : f32
      %29 = vector.broadcast %cst_23 : f32 to vector<8x32xf32>
      %30 = arith.mulf %29, %28 : vector<8x32xf32>
      %31 = math.tanh %30 : vector<8x32xf32>
      %cst_24 = arith.constant 1.000000e+00 : f32
      %32 = vector.broadcast %cst_24 : f32 to vector<8x32xf32>
      %33 = arith.addf %32, %31 : vector<8x32xf32>
      %34 = arith.mulf %23, %33 : vector<8x32xf32>
      %cst_25 = arith.constant dense<0.000000e+00> : vector<8xf32>
      %35 = vector.multi_reduction <add>, %34, %cst_25 [1] : vector<8x32xf32> to vector<8xf32>
      %36 = vector.shape_cast %35 : vector<8xf32> to vector<8x1xf32>
      %cst_26 = arith.constant 3.125000e-02 : f32
      %37 = vector.broadcast %cst_26 : f32 to vector<8x1xf32>
      %38 = arith.mulf %36, %37 : vector<8x1xf32>
      %39 = vector.broadcast %38 : vector<8x1xf32> to vector<8x32xf32>
      %40 = arith.subf %34, %39 : vector<8x32xf32>
      %41 = arith.mulf %40, %40 : vector<8x32xf32>
      %cst_27 = arith.constant dense<0.000000e+00> : vector<8xf32>
      %42 = vector.multi_reduction <add>, %41, %cst_27 [1] : vector<8x32xf32> to vector<8xf32>
      %43 = vector.shape_cast %42 : vector<8xf32> to vector<8x1xf32>
      %cst_28 = arith.constant 3.125000e-02 : f32
      %44 = vector.broadcast %cst_28 : f32 to vector<8x1xf32>
      %45 = arith.mulf %43, %44 : vector<8x1xf32>
      %cst_29 = arith.constant 9.99999996E-13 : f32
      %46 = vector.broadcast %cst_29 : f32 to vector<8x1xf32>
      %47 = arith.addf %45, %46 : vector<8x1xf32>
      %48 = math.rsqrt %47 : vector<8x1xf32>
      %49 = vector.broadcast %48 : vector<8x1xf32> to vector<8x32xf32>
      %50 = arith.mulf %40, %49 : vector<8x32xf32>
      %51 = vector.broadcast %16 : vector<1x32xf32> to vector<8x32xf32>
      %52 = arith.mulf %50, %51 : vector<8x32xf32>
      %53 = vector.broadcast %17 : vector<1x32xf32> to vector<8x32xf32>
      %54 = arith.addf %52, %53 : vector<8x32xf32>
      %55 = arith.truncf %54 : vector<8x32xf32> to vector<8x32xbf16>
      %c0_30 = arith.constant 0 : index
      %c0_31 = arith.constant 0 : index
      %56 = vector.load %arg8[%c0_30, %c0_31] : memref<32x32xbf16, #tpu.memory_space<vmem>>, vector<32x32xbf16>
      %cst_32 = arith.constant dense<0.000000e+00> : vector<8x32xf32>
      %57 = tpu.matmul %55, %56, %cst_32 {dimension_numbers = #tpu.dot_dimension_numbers<[1], [0], [0], [1], [0, 0, 1, 1], [], []>} : vector<8x32xbf16>, vector<32x32xbf16>, vector<8x32xf32> -> vector<8x32xf32>
      %c0_33 = arith.constant 0 : index
      %c0_34 = arith.constant 0 : index
      %58 = vector.load %arg9[%c0_33, %c0_34] : memref<1x32xf32, #tpu.memory_space<vmem>>, vector<1x32xf32>
      %59 = vector.broadcast %58 : vector<1x32xf32> to vector<8x32xf32>
      %60 = arith.addf %57, %59 : vector<8x32xf32>
      %61 = arith.truncf %60 : vector<8x32xf32> to vector<8x32xbf16>
      %c0_35 = arith.constant 0 : index
      %c0_36 = arith.constant 0 : index
      %62 = vector.load %arg18[%c0_35, %c0_36] : memref<8x32xbf16, #tpu.memory_space<vmem>>, vector<8x32xbf16>
      tpu.vector_store %arg18[%c0_35, %c0_36], %61 {strides = array<i32>} : memref<8x32xbf16, #tpu.memory_space<vmem>>, vector<8x32xbf16>,
      %c0_37 = arith.constant 0 : index
      %c0_38 = arith.constant 0 : index
      %63 = vector.load %arg10[%c0_37, %c0_38] : memref<32x32xbf16, #tpu.memory_space<vmem>>, vector<32x32xbf16>
      %cst_39 = arith.constant dense<0.000000e+00> : vector<8x32xf32>
      %64 = tpu.matmul %61, %63, %cst_39 {dimension_numbers = #tpu.dot_dimension_numbers<[1], [0], [0], [1], [0, 0, 1, 1], [], []>} : vector<8x32xbf16>, vector<32x32xbf16>, vector<8x32xf32> -> vector<8x32xf32>
      %c0_40 = arith.constant 0 : index
      %c0_41 = arith.constant 0 : index
      %65 = vector.load %arg11[%c0_40, %c0_41] : memref<1x32xf32, #tpu.memory_space<vmem>>, vector<1x32xf32>
      %66 = vector.broadcast %65 : vector<1x32xf32> to vector<8x32xf32>
      %67 = arith.addf %64, %66 : vector<8x32xf32>
      %68 = arith.truncf %67 : vector<8x32xf32> to vector<8x32xbf16>
      %c0_42 = arith.constant 0 : index
      %c0_43 = arith.constant 0 : index
      %69 = vector.load %arg12[%c0_42, %c0_43] : memref<32x8xbf16, #tpu.memory_space<vmem>>, vector<32x8xbf16>
      %cst_44 = arith.constant dense<0.000000e+00> : vector<8x8xf32>
      %70 = tpu.matmul %68, %69, %cst_44 {dimension_numbers = #tpu.dot_dimension_numbers<[1], [0], [0], [1], [0, 0, 1, 1], [], []>} : vector<8x32xbf16>, vector<32x8xbf16>, vector<8x8xf32> -> vector<8x8xf32>
      %c0_45 = arith.constant 0 : index
      %c0_46 = arith.constant 0 : index
      %71 = vector.load %arg13[%c0_45, %c0_46] : memref<1x8xf32, #tpu.memory_space<vmem>>, vector<1x8xf32>
      %72 = vector.broadcast %71 : vector<1x8xf32> to vector<8x8xf32>
      %73 = arith.addf %70, %72 : vector<8x8xf32>
      %c0_47 = arith.constant 0 : index
      %c0_48 = arith.constant 0 : index
      %c0_49 = arith.constant 0 : index
      %74 = vector.load %arg17[%c0_47, %c0_48, %c0_49] : memref<1x8x8xf32, #tpu.memory_space<vmem>>, vector<1x8x8xf32>
      %75 = vector.shape_cast %74 : vector<1x8x8xf32> to vector<8x8xf32>
      %76 = vector.shape_cast %73 : vector<8x8xf32> to vector<1x8x8xf32>
      tpu.vector_store %arg17[%c0_47, %c0_48, %c0_49], %76 {strides = array<i32>} : memref<1x8x8xf32, #tpu.memory_space<vmem>>, vector<1x8x8xf32>,
    } else {
    }
    %c0 = arith.constant 0 : index
    %c0_1 = arith.constant 0 : index
    %3 = vector.load %arg18[%c0, %c0_1] : memref<8x32xbf16, #tpu.memory_space<vmem>>, vector<8x32xbf16>
    %c0_2 = arith.constant 0 : index
    %c0_3 = arith.constant 0 : index
    %4 = vector.load %arg14[%c0_2, %c0_3] : memref<32x64xbf16, #tpu.memory_space<vmem>>, vector<32x64xbf16>
    %cst = arith.constant dense<0.000000e+00> : vector<8x64xf32>
    %5 = tpu.matmul %3, %4, %cst {dimension_numbers = #tpu.dot_dimension_numbers<[1], [0], [0], [1], [0, 0, 1, 1], [], []>} : vector<8x32xbf16>, vector<32x64xbf16>, vector<8x64xf32> -> vector<8x64xf32>
    %c0_4 = arith.constant 0 : index
    %c0_5 = arith.constant 0 : index
    %6 = vector.load %arg15[%c0_4, %c0_5] : memref<1x64xf32, #tpu.memory_space<vmem>>, vector<1x64xf32>
    %7 = vector.broadcast %6 : vector<1x64xf32> to vector<8x64xf32>
    %8 = arith.addf %5, %7 : vector<8x64xf32>
    %c0_6 = arith.constant 0 : index
    %c0_7 = arith.constant 0 : index
    %c0_8 = arith.constant 0 : index
    %9 = vector.load %arg16[%c0_6, %c0_7, %c0_8] : memref<1x8x64xf32, #tpu.memory_space<vmem>>, vector<1x8x64xf32>
    %10 = vector.shape_cast %9 : vector<1x8x64xf32> to vector<8x64xf32>
    %11 = vector.shape_cast %8 : vector<8x64xf32> to vector<1x8x64xf32>
    tpu.vector_store %arg16[%c0_6, %c0_7, %c0_8], %11 {strides = array<i32>} : memref<1x8x64xf32, #tpu.memory_space<vmem>>, vector<1x8x64xf32>,
    return
  }
  func.func @transform_0(%arg0: i32, %arg1: i32, %arg2: i32) -> (i32, i32, i32) {
    %c0_i32 = arith.constant 0 : i32
    %c0_i32_0 = arith.constant 0 : i32
    return %arg0, %arg1, %c0_i32 : i32, i32, i32
  }
  func.func @transform_1(%arg0: i32, %arg1: i32, %arg2: i32) -> (i32, i32) {
    %c0_i32 = arith.constant 0 : i32
    %c0_i32_0 = arith.constant 0 : i32
    %c0_i32_1 = arith.constant 0 : i32
    return %c0_i32, %c0_i32_0 : i32, i32
  }
  func.func @transform_2(%arg0: i32, %arg1: i32, %arg2: i32) -> (i32, i32) {
    %c0_i32 = arith.constant 0 : i32
    %c0_i32_0 = arith.constant 0 : i32
    %c0_i32_1 = arith.constant 0 : i32
    return %c0_i32, %c0_i32_0 : i32, i32
  }
  func.func @transform_3(%arg0: i32, %arg1: i32, %arg2: i32) -> (i32, i32) {
    %c0_i32 = arith.constant 0 : i32
    %c0_i32_0 = arith.constant 0 : i32
    %c0_i32_1 = arith.constant 0 : i32
    return %c0_i32, %c0_i32_0 : i32, i32
  }
  func.func @transform_4(%arg0: i32, %arg1: i32, %arg2: i32) -> (i32, i32) {
    %c0_i32 = arith.constant 0 : i32
    %c0_i32_0 = arith.constant 0 : i32
    %c0_i32_1 = arith.constant 0 : i32
    return %c0_i32, %c0_i32_0 : i32, i32
  }
  func.func @transform_5(%arg0: i32, %arg1: i32, %arg2: i32) -> (i32, i32) {
    %c0_i32 = arith.constant 0 : i32
    %c0_i32_0 = arith.constant 0 : i32
    %c0_i32_1 = arith.constant 0 : i32
    return %c0_i32, %c0_i32_0 : i32, i32
  }
  func.func @transform_6(%arg0: i32, %arg1: i32, %arg2: i32) -> (i32, i32) {
    %c0_i32 = arith.constant 0 : i32
    %c0_i32_0 = arith.constant 0 : i32
    %c0_i32_1 = arith.constant 0 : i32
    return %c0_i32, %c0_i32_0 : i32, i32
  }
  func.func @transform_7(%arg0: i32, %arg1: i32, %arg2: i32) -> (i32, i32) {
    %c0_i32 = arith.constant 0 : i32
    %c0_i32_0 = arith.constant 0 : i32
    %c0_i32_1 = arith.constant 0 : i32
    return %c0_i32, %c0_i32_0 : i32, i32
  }
  func.func @transform_8(%arg0: i32, %arg1: i32, %arg2: i32) -> (i32, i32) {
    %c0_i32 = arith.constant 0 : i32
    %c0_i32_0 = arith.constant 0 : i32
    %c0_i32_1 = arith.constant 0 : i32
    return %c0_i32, %c0_i32_0 : i32, i32
  }
  func.func @transform_9(%arg0: i32, %arg1: i32, %arg2: i32) -> (i32, i32) {
    %c0_i32 = arith.constant 0 : i32
    %c0_i32_0 = arith.constant 0 : i32
    %c0_i32_1 = arith.constant 0 : i32
    return %c0_i32, %c0_i32_0 : i32, i32
  }
  func.func @transform_10(%arg0: i32, %arg1: i32, %arg2: i32) -> (i32, i32) {
    %c0_i32 = arith.constant 0 : i32
    %c0_i32_0 = arith.constant 0 : i32
    %c0_i32_1 = arith.constant 0 : i32
    return %c0_i32, %c0_i32_0 : i32, i32
  }
  func.func @transform_11(%arg0: i32, %arg1: i32, %arg2: i32) -> (i32, i32) {
    %c0_i32 = arith.constant 0 : i32
    %c0_i32_0 = arith.constant 0 : i32
    return %c0_i32, %arg2 : i32, i32
  }
  func.func @transform_12(%arg0: i32, %arg1: i32, %arg2: i32) -> (i32, i32) {
    %c0_i32 = arith.constant 0 : i32
    %c0_i32_0 = arith.constant 0 : i32
    return %c0_i32, %arg2 : i32, i32
  }
  func.func @transform_13(%arg0: i32, %arg1: i32, %arg2: i32) -> (i32, i32, i32) {
    %c0_i32 = arith.constant 0 : i32
    return %arg0, %arg1, %arg2 : i32, i32, i32
  }
  func.func @transform_14(%arg0: i32, %arg1: i32, %arg2: i32) -> (i32, i32, i32) {
    %c0_i32 = arith.constant 0 : i32
    %c0_i32_0 = arith.constant 0 : i32
    return %arg0, %arg1, %c0_i32 : i32, i32, i32
  }
}

</mosaic_0001>

<llo_original>
// kernel: vdnet_prediction_head.3
$region0: #{vdnet_prediction_head.3}
  #allocation0 [shape = 'u32[]', space=smem, size = 0x4, offset = 0x4, fixed_abs, tag = 'smem constant byte address 0x4 - core index']
  #allocation1 [shape = 'u32[72,128]{1,0:T(1,128)}', space=vmem, size = 0x9000, scoped, tag = 'internal scratch']
  #allocation2 [shape = 'bf16[80,32]{1,0:T(8,128)(2,1)}', space=vmem, size = 0x5000, scoped, tag = 'scratch operand']
  %s0 = inlined_call_operand.vmem [shape: f32[74,32], index: 0, kind: input, shape index: {}]
  %s1 = inlined_call_operand.vmem [shape: bf16[32,32], index: 1, kind: input, shape index: {}]
  %s2 = inlined_call_operand.vmem [shape: f32[1,32], index: 2, kind: input, shape index: {}]
  %s3 = inlined_call_operand.vmem [shape: f32[1,32], index: 3, kind: input, shape index: {}]
  %s4 = inlined_call_operand.vmem [shape: f32[1,32], index: 4, kind: input, shape index: {}]
  %s5 = inlined_call_operand.vmem [shape: bf16[32,16], index: 5, kind: input, shape index: {}]
  %s6 = inlined_call_operand.vmem [shape: f32[1,16], index: 6, kind: input, shape index: {}]
  %s7 = inlined_call_operand.vmem [shape: f32[74,16], index: 7, kind: output, shape index: {}]
  %s8 = sld [smem:[#allocation0]]
  $region42: #{vdnet_prediction_head.3} parent=0
    _
  %s10 = ssub.s32 1, %s8
  %s11 = scalar_select 0, %s10, %s8
  // Predicated region
  $region2: #{vdnet_prediction_head.3} parent=0 // pred_check
    _
  $region3: #{vdnet_prediction_head.3} parent=0 // pred_check_branch
    %13 = sbr.rel (0) target = $region5
  $region4: #{vdnet_prediction_head.3} parent=0 // pred_region
    _
  $region5: #{vdnet_prediction_head.3} parent=0 // pred_fallthru
    _
  // Predicated region
  $region6: #{vdnet_prediction_head.3} parent=0 // pred_check
    _
  $region7: #{vdnet_prediction_head.3} parent=0 // pred_check_branch
    %15 = sbr.rel (0) target = $region9
  $region8: #{vdnet_prediction_head.3} parent=0 // pred_region
    _
  $region9: #{vdnet_prediction_head.3} parent=0 // pred_fallthru
    _
  // Predicated region
  $region10: #{vdnet_prediction_head.3} parent=0 // pred_check
    _
  $region11: #{vdnet_prediction_head.3} parent=0 // pred_check_branch
    %17 = sbr.rel (0) target = $region13
  $region12: #{vdnet_prediction_head.3} parent=0 // pred_region
    _
  $region13: #{vdnet_prediction_head.3} parent=0 // pred_fallthru
    _
  // Predicated region
  $region14: #{vdnet_prediction_head.3} parent=0 // pred_check
    _
  $region15: #{vdnet_prediction_head.3} parent=0 // pred_check_branch
    %19 = sbr.rel (0) target = $region17
  $region16: #{vdnet_prediction_head.3} parent=0 // pred_region
    _
  $region17: #{vdnet_prediction_head.3} parent=0 // pred_fallthru
    _
  // Predicated region
  $region18: #{vdnet_prediction_head.3} parent=0 // pred_check
    _
  $region19: #{vdnet_prediction_head.3} parent=0 // pred_check_branch
    %21 = sbr.rel (0) target = $region21
  $region20: #{vdnet_prediction_head.3} parent=0 // pred_region
    _
  $region21: #{vdnet_prediction_head.3} parent=0 // pred_fallthru
    _
  // Predicated region
  $region22: #{vdnet_prediction_head.3} parent=0 // pred_check
    _
  $region23: #{vdnet_prediction_head.3} parent=0 // pred_check_branch
    %23 = sbr.rel (0) target = $region25
  $region24: #{vdnet_prediction_head.3} parent=0 // pred_region
    _
  $region25: #{vdnet_prediction_head.3} parent=0 // pred_fallthru
    _
  // Predicated region
  $region26: #{vdnet_prediction_head.3} parent=0 // pred_check
    _
  $region27: #{vdnet_prediction_head.3} parent=0 // pred_check_branch
    %25 = sbr.rel (0) target = $region29
  $region28: #{vdnet_prediction_head.3} parent=0 // pred_region
    _
  $region29: #{vdnet_prediction_head.3} parent=0 // pred_fallthru
    _
  %p27 = scmp.eq.s32.totalorder 0, 0
  // Predicated region
  $region30: #{vdnet_prediction_head.3} parent=0 // pred_check
    %p28 = pneg %p27
  $region31: #{vdnet_prediction_head.3} parent=0 // pred_check_branch
    %30 = sbr.rel (%p28) target = $region33
  $region32: #{vdnet_prediction_head.3} parent=0 // pred_region
    %v31 = vld [vmem:[%s0] sm:$0xff]
    %v32 = vld [vmem:[%s0 + $0x8] sm:$0xff]
    %v33 = vld [vmem:[%s0 + $0x10] sm:$0xff]
    %v34 = vld [vmem:[%s0 + $0x18] sm:$0xff]
    %v35 = vld [vmem:[%s0 + $0x20] sm:$0xff]
    %v36 = vld [vmem:[%s0 + $0x28] sm:$0xff]
    %v37 = vld [vmem:[%s0 + $0x30] sm:$0xff]
    %v38 = vld [vmem:[%s0 + $0x38] sm:$0xff]
    %v39 = vld [vmem:[%s0 + $0x40] sm:$0xff]
    %v40 = vld [vmem:[%s0 + $0x48] sm:$0xff]
    %v41 = vld [vmem:[%s1] sm:$0xf]
    %v42 = vld [vmem:[%s1 + $0x4] sm:$0xf]
    %v43 = vld [vmem:[%s1 + $0x8] sm:$0xf]
    %v44 = vld [vmem:[%s1 + $0xc] sm:$0xf]
    %v45 = vld [vmem:[%s2] sm:$0x1]
    %v46 = vld [vmem:[%s3] sm:$0x1]
    %v47 = vld [vmem:[%s4] sm:$0x1]
    %v48 = vpack.c.bf16 %v32, %v31
    %v49 = vpack.c.bf16 %v34, %v33
    %v50 = vpack.c.bf16 %v36, %v35
    %v51 = vpack.c.bf16 %v38, %v37
    %v52 = vpack.c.bf16 %v40, %v39
    %v54 = vperm.slane %v45, 0
    %v60 = vunpack.c.l.b16 %v41
    %v61 = vunpack.c.l.b16 %v42
    %v62 = vunpack.c.l.b16 %v43
    %v63 = vunpack.c.l.b16 %v44
    %v64 = vpack.c.b16 %v61, %v60
    %v65 = vpack.c.b16 %v63, %v62
    %vm68 = vcmask 261120
    %v70 = vsel %vm68, %v48, 0
    %v73 = vsel %vm68, %v49, 0
    %v76 = vsel %vm68, %v50, 0
    %v79 = vsel %vm68, %v51, 0
    %v82 = vsel %vm68, %v52, 0
    %84 = vmatpush.bf16.msra.mxu0 0
    %85 = vmatpush.bf16.msra.mxu0 0
    %86 = vmatpush.bf16.msra.mxu0 0
    %87 = vmatpush.bf16.msra.mxu0 0
    %88 = vmatpush.bf16.msra.mxu0 0
    %89 = vmatpush.bf16.msra.mxu0 0
    %90 = vmatpush.bf16.msra.mxu0 %v65
    %91 = vmatpush.bf16.msra.mxu0 %v64
    %92 = vmatmul.bf16.gmra.mxu0 %v70
    %v93 = vpop.f32.mrf.mxu0
    %v94 = vadd.f32 %v54, %v93
    %v95 = vpop.f32.mrf.mxu0
    %v96 = vadd.f32 %v54, %v95
    %97 = vmatmul.bf16.gmra.mxu0 %v73
    %v98 = vpop.f32.mrf.mxu0
    %v99 = vadd.f32 %v54, %v98
    %v100 = vpop.f32.mrf.mxu0
    %v101 = vadd.f32 %v54, %v100
    %102 = vmatmul.bf16.gmra.mxu0 %v76
    %v103 = vpop.f32.mrf.mxu0
    %v104 = vadd.f32 %v54, %v103
    %v105 = vpop.f32.mrf.mxu0
    %v106 = vadd.f32 %v54, %v105
    %107 = vmatmul.bf16.gmra.mxu0 %v79
    %v108 = vpop.f32.mrf.mxu0
    %v109 = vadd.f32 %v54, %v108
    %v110 = vpop.f32.mrf.mxu0
    %v111 = vadd.f32 %v54, %v110
    %112 = vmatmul.bf16.gmra.mxu0 %v82
    %v113 = vpop.f32.mrf.mxu0
    %v114 = vadd.f32 %v54, %v113
    %v115 = vpop.f32.mrf.mxu0
    %v116 = vadd.f32 %v54, %v115
    %117 = vdwg.mxu0
    %v118 = vmul.f32 %v94, 0.5
    %v119 = vmul.f32 %v96, 0.5
    %v120 = vmul.f32 %v99, 0.5
    %v121 = vmul.f32 %v101, 0.5
    %v122 = vmul.f32 %v104, 0.5
    %v123 = vmul.f32 %v106, 0.5
    %v124 = vmul.f32 %v109, 0.5
    %v125 = vmul.f32 %v111, 0.5
    %v126 = vmul.f32 %v114, 0.5
    %v127 = vmul.f32 %v116, 0.5
    %v128 = vmul.f32 %v94, 0.044715
    %v129 = vmul.f32 %v96, 0.044715
    %v130 = vmul.f32 %v99, 0.044715
    %v131 = vmul.f32 %v101, 0.044715
    %v132 = vmul.f32 %v104, 0.044715
    %v133 = vmul.f32 %v106, 0.044715
    %v134 = vmul.f32 %v109, 0.044715
    %v135 = vmul.f32 %v111, 0.044715
    %v136 = vmul.f32 %v114, 0.044715
    %v137 = vmul.f32 %v116, 0.044715
    %v138 = vmul.f32 %v128, %v94
    %v139 = vmul.f32 %v129, %v96
    %v140 = vmul.f32 %v130, %v99
    %v141 = vmul.f32 %v131, %v101
    %v142 = vmul.f32 %v132, %v104
    %v143 = vmul.f32 %v133, %v106
    %v144 = vmul.f32 %v134, %v109
    %v145 = vmul.f32 %v135, %v111
    %v146 = vmul.f32 %v136, %v114
    %v147 = vmul.f32 %v137, %v116
    %v148 = vmul.f32 %v138, %v94
    %v149 = vmul.f32 %v139, %v96
    %v150 = vmul.f32 %v140, %v99
    %v151 = vmul.f32 %v141, %v101
    %v152 = vmul.f32 %v142, %v104
    %v153 = vmul.f32 %v143, %v106
    %v154 = vmul.f32 %v144, %v109
    %v155 = vmul.f32 %v145, %v111
    %v156 = vmul.f32 %v146, %v114
    %v157 = vmul.f32 %v147, %v116
    %v158 = vadd.f32 %v94, %v148
    %v159 = vadd.f32 %v96, %v149
    %v160 = vadd.f32 %v99, %v150
    %v161 = vadd.f32 %v101, %v151
    %v162 = vadd.f32 %v104, %v152
    %v163 = vadd.f32 %v106, %v153
    %v164 = vadd.f32 %v109, %v154
    %v165 = vadd.f32 %v111, %v155
    %v166 = vadd.f32 %v114, %v156
    %v167 = vadd.f32 %v116, %v157
    %v168 = vmul.f32 %v158, 0.7978846
    %v169 = vmul.f32 %v159, 0.7978846
    %v170 = vmul.f32 %v160, 0.7978846
    %v171 = vmul.f32 %v161, 0.7978846
    %v172 = vmul.f32 %v162, 0.7978846
    %v173 = vmul.f32 %v163, 0.7978846
    %v174 = vmul.f32 %v164, 0.7978846
    %v175 = vmul.f32 %v165, 0.7978846
    %v176 = vmul.f32 %v166, 0.7978846
    %v177 = vmul.f32 %v167, 0.7978846
    %v178 = vtanh.pop %v168
    %v179 = vtanh.pop %v169
    %v180 = vtanh.pop %v170
    %v181 = vtanh.pop %v171
    %v182 = vtanh.pop %v172
    %v183 = vtanh.pop %v173
    %v184 = vtanh.pop %v174
    %v185 = vtanh.pop %v175
    %v186 = vtanh.pop %v176
    %v187 = vtanh.pop %v177
    %v188 = vadd.f32 %v178, 1.0
    %v189 = vadd.f32 %v179, 1.0
    %v190 = vadd.f32 %v180, 1.0
    %v191 = vadd.f32 %v181, 1.0
    %v192 = vadd.f32 %v182, 1.0
    %v193 = vadd.f32 %v183, 1.0
    %v194 = vadd.f32 %v184, 1.0
    %v195 = vadd.f32 %v185, 1.0
    %v196 = vadd.f32 %v186, 1.0
    %v197 = vadd.f32 %v187, 1.0
    %v198 = vmul.f32 %v118, %v188
    %v199 = vmul.f32 %v119, %v189
    %v200 = vmul.f32 %v120, %v190
    %v201 = vmul.f32 %v121, %v191
    %v202 = vmul.f32 %v122, %v192
    %v203 = vmul.f32 %v123, %v193
    %v204 = vmul.f32 %v124, %v194
    %v205 = vmul.f32 %v125, %v195
    %v206 = vmul.f32 %v126, %v196
    %v207 = vmul.f32 %v127, %v197
    %v208 = vsel %vm68, %v198, 0.0
    %209 = vadd.xlane.f32.xlu0 %v208
    %v210 = vpop.xlane.xlu0 %209
    %v211 = vsel %vm68, %v199, 0.0
    %212 = vadd.xlane.f32.xlu0 %v211
    %v213 = vpop.xlane.xlu0 %212
    %v214 = vsel %vm68, %v200, 0.0
    %215 = vadd.xlane.f32.xlu0 %v214
    %v216 = vpop.xlane.xlu0 %215
    %v217 = vsel %vm68, %v201, 0.0
    %218 = vadd.xlane.f32.xlu0 %v217
    %v219 = vpop.xlane.xlu0 %218
    %v220 = vsel %vm68, %v202, 0.0
    %221 = vadd.xlane.f32.xlu0 %v220
    %v222 = vpop.xlane.xlu0 %221
    %v223 = vsel %vm68, %v203, 0.0
    %224 = vadd.xlane.f32.xlu0 %v223
    %v225 = vpop.xlane.xlu0 %224
    %v226 = vsel %vm68, %v204, 0.0
    %227 = vadd.xlane.f32.xlu0 %v226
    %v228 = vpop.xlane.xlu0 %227
    %v229 = vsel %vm68, %v205, 0.0
    %230 = vadd.xlane.f32.xlu0 %v229
    %v231 = vpop.xlane.xlu0 %230
    %v232 = vsel %vm68, %v206, 0.0
    %233 = vadd.xlane.f32.xlu0 %v232
    %v234 = vpop.xlane.xlu0 %233
    %v235 = vsel %vm68, %v207, 0.0
    %236 = vadd.xlane.f32.xlu0 %v235
    %v237 = vpop.xlane.xlu0 %236
    %v238 = vmul.f32 %v210, 0.03125
    %v239 = vmul.f32 %v213, 0.03125
    %v240 = vmul.f32 %v216, 0.03125
    %v241 = vmul.f32 %v219, 0.03125
    %v242 = vmul.f32 %v222, 0.03125
    %v243 = vmul.f32 %v225, 0.03125
    %v244 = vmul.f32 %v228, 0.03125
    %v245 = vmul.f32 %v231, 0.03125
    %v246 = vmul.f32 %v234, 0.03125
    %v247 = vmul.f32 %v237, 0.03125
    %v248 = vsub.f32 %v198, %v238
    %v249 = vsub.f32 %v199, %v239
    %v250 = vsub.f32 %v200, %v240
    %v251 = vsub.f32 %v201, %v241
    %v252 = vsub.f32 %v202, %v242
    %v253 = vsub.f32 %v203, %v243
    %v254 = vsub.f32 %v204, %v244
    %v255 = vsub.f32 %v205, %v245
    %v256 = vsub.f32 %v206, %v246
    %v257 = vsub.f32 %v207, %v247
    %v258 = vmul.f32 %v248, %v248
    %v259 = vmul.f32 %v249, %v249
    %v260 = vmul.f32 %v250, %v250
    %v261 = vmul.f32 %v251, %v251
    %v262 = vmul.f32 %v252, %v252
    %v263 = vmul.f32 %v253, %v253
    %v264 = vmul.f32 %v254, %v254
    %v265 = vmul.f32 %v255, %v255
    %v266 = vmul.f32 %v256, %v256
    %v267 = vmul.f32 %v257, %v257
    %v268 = vsel %vm68, %v258, 0.0
    %269 = vadd.xlane.f32.xlu0 %v268
    %v270 = vpop.xlane.xlu0 %269
    %v271 = vsel %vm68, %v259, 0.0
    %272 = vadd.xlane.f32.xlu0 %v271
    %v273 = vpop.xlane.xlu0 %272
    %v274 = vsel %vm68, %v260, 0.0
    %275 = vadd.xlane.f32.xlu0 %v274
    %v276 = vpop.xlane.xlu0 %275
    %v277 = vsel %vm68, %v261, 0.0
    %278 = vadd.xlane.f32.xlu0 %v277
    %v279 = vpop.xlane.xlu0 %278
    %v280 = vsel %vm68, %v262, 0.0
    %281 = vadd.xlane.f32.xlu0 %v280
    %v282 = vpop.xlane.xlu0 %281
    %v283 = vsel %vm68, %v263, 0.0
    %284 = vadd.xlane.f32.xlu0 %v283
    %v285 = vpop.xlane.xlu0 %284
    %v286 = vsel %vm68, %v264, 0.0
    %287 = vadd.xlane.f32.xlu0 %v286
    %v288 = vpop.xlane.xlu0 %287
    %v289 = vsel %vm68, %v265, 0.0
    %290 = vadd.xlane.f32.xlu0 %v289
    %v291 = vpop.xlane.xlu0 %290
    %v292 = vsel %vm68, %v266, 0.0
    %293 = vadd.xlane.f32.xlu0 %v292
    %v294 = vpop.xlane.xlu0 %293
    %v295 = vsel %vm68, %v267, 0.0
    %296 = vadd.xlane.f32.xlu0 %v295
    %v297 = vpop.xlane.xlu0 %296
    %v298 = vmul.f32 %v270, 0.03125
    %v299 = vmul.f32 %v273, 0.03125
    %v300 = vmul.f32 %v276, 0.03125
    %v301 = vmul.f32 %v279, 0.03125
    %v302 = vmul.f32 %v282, 0.03125
    %v303 = vmul.f32 %v285, 0.03125
    %v304 = vmul.f32 %v288, 0.03125
    %v305 = vmul.f32 %v291, 0.03125
    %v306 = vmul.f32 %v294, 0.03125
    %v307 = vmul.f32 %v297, 0.03125
    %v308 = vadd.f32 %v298, 1e-12
    %v309 = vadd.f32 %v299, 1e-12
    %v310 = vadd.f32 %v300, 1e-12
    %v311 = vadd.f32 %v301, 1e-12
    %v312 = vadd.f32 %v302, 1e-12
    %v313 = vadd.f32 %v303, 1e-12
    %v314 = vadd.f32 %v304, 1e-12
    %v315 = vadd.f32 %v305, 1e-12
    %v316 = vadd.f32 %v306, 1e-12
    %v317 = vadd.f32 %v307, 1e-12
    %v318 = vrsqrt.pop %v308
    %v319 = vmul.f32 %v318, %v308
    %v320 = vmul.f32 %v319, %v318
    %v321 = vmul.f32 0.5, %v320
    %v322 = vsub.f32 1.5, %v321
    %v323 = vmul.f32 %v318, %v322
    %vm324 = vweird.f32 %v308
    %vm325 = vweird.f32 %v318
    %vm326 = vmor %vm324, %vm325
    %v327 = vsel %vm326, %v318, %v323
    %v328 = vrsqrt.pop %v309
    %v329 = vmul.f32 %v328, %v309
    %v330 = vmul.f32 %v329, %v328
    %v331 = vmul.f32 0.5, %v330
    %v332 = vsub.f32 1.5, %v331
    %v333 = vmul.f32 %v328, %v332
    %vm334 = vweird.f32 %v309
    %vm335 = vweird.f32 %v328
    %vm336 = vmor %vm334, %vm335
    %v337 = vsel %vm336, %v328, %v333
    %v338 = vrsqrt.pop %v310
    %v339 = vmul.f32 %v338, %v310
    %v340 = vmul.f32 %v339, %v338
    %v341 = vmul.f32 0.5, %v340
    %v342 = vsub.f32 1.5, %v341
    %v343 = vmul.f32 %v338, %v342
    %vm344 = vweird.f32 %v310
    %vm345 = vweird.f32 %v338
    %vm346 = vmor %vm344, %vm345
    %v347 = vsel %vm346, %v338, %v343
    %v348 = vrsqrt.pop %v311
    %v349 = vmul.f32 %v348, %v311
    %v350 = vmul.f32 %v349, %v348
    %v351 = vmul.f32 0.5, %v350
    %v352 = vsub.f32 1.5, %v351
    %v353 = vmul.f32 %v348, %v352
    %vm354 = vweird.f32 %v311
    %vm355 = vweird.f32 %v348
    %vm356 = vmor %vm354, %vm355
    %v357 = vsel %vm356, %v348, %v353
    %v358 = vrsqrt.pop %v312
    %v359 = vmul.f32 %v358, %v312
    %v360 = vmul.f32 %v359, %v358
    %v361 = vmul.f32 0.5, %v360
    %v362 = vsub.f32 1.5, %v361
    %v363 = vmul.f32 %v358, %v362
    %vm364 = vweird.f32 %v312
    %vm365 = vweird.f32 %v358
    %vm366 = vmor %vm364, %vm365
    %v367 = vsel %vm366, %v358, %v363
    %v368 = vrsqrt.pop %v313
    %v369 = vmul.f32 %v368, %v313
    %v370 = vmul.f32 %v369, %v368
    %v371 = vmul.f32 0.5, %v370
    %v372 = vsub.f32 1.5, %v371
    %v373 = vmul.f32 %v368, %v372
    %vm374 = vweird.f32 %v313
    %vm375 = vweird.f32 %v368
    %vm376 = vmor %vm374, %vm375
    %v377 = vsel %vm376, %v368, %v373
    %v378 = vrsqrt.pop %v314
    %v379 = vmul.f32 %v378, %v314
    %v380 = vmul.f32 %v379, %v378
    %v381 = vmul.f32 0.5, %v380
    %v382 = vsub.f32 1.5, %v381
    %v383 = vmul.f32 %v378, %v382
    %vm384 = vweird.f32 %v314
    %vm385 = vweird.f32 %v378
    %vm386 = vmor %vm384, %vm385
    %v387 = vsel %vm386, %v378, %v383
    %v388 = vrsqrt.pop %v315
    %v389 = vmul.f32 %v388, %v315
    %v390 = vmul.f32 %v389, %v388
    %v391 = vmul.f32 0.5, %v390
    %v392 = vsub.f32 1.5, %v391
    %v393 = vmul.f32 %v388, %v392
    %vm394 = vweird.f32 %v315
    %vm395 = vweird.f32 %v388
    %vm396 = vmor %vm394, %vm395
    %v397 = vsel %vm396, %v388, %v393
    %v398 = vrsqrt.pop %v316
    %v399 = vmul.f32 %v398, %v316
    %v400 = vmul.f32 %v399, %v398
    %v401 = vmul.f32 0.5, %v400
    %v402 = vsub.f32 1.5, %v401
    %v403 = vmul.f32 %v398, %v402
    %vm404 = vweird.f32 %v316
    %vm405 = vweird.f32 %v398
    %vm406 = vmor %vm404, %vm405
    %v407 = vsel %vm406, %v398, %v403
    %v408 = vrsqrt.pop %v317
    %v409 = vmul.f32 %v408, %v317
    %v410 = vmul.f32 %v409, %v408
    %v411 = vmul.f32 0.5, %v410
    %v412 = vsub.f32 1.5, %v411
    %v413 = vmul.f32 %v408, %v412
    %vm414 = vweird.f32 %v317
    %vm415 = vweird.f32 %v408
    %vm416 = vmor %vm414, %vm415
    %v417 = vsel %vm416, %v408, %v413
    %v418 = vmul.f32 %v248, %v327
    %v419 = vmul.f32 %v249, %v337
    %v420 = vmul.f32 %v250, %v347
    %v421 = vmul.f32 %v251, %v357
    %v422 = vmul.f32 %v252, %v367
    %v423 = vmul.f32 %v253, %v377
    %v424 = vmul.f32 %v254, %v387
    %v425 = vmul.f32 %v255, %v397
    %v426 = vmul.f32 %v256, %v407
    %v427 = vmul.f32 %v257, %v417
    %v429 = vperm.slane %v46, 0
    %v431 = vmul.f32 %v418, %v429
    %v432 = vmul.f32 %v419, %v429
    %v433 = vmul.f32 %v420, %v429
    %v434 = vmul.f32 %v421, %v429
    %v435 = vmul.f32 %v422, %v429
    %v436 = vmul.f32 %v423, %v429
    %v437 = vmul.f32 %v424, %v429
    %v438 = vmul.f32 %v425, %v429
    %v439 = vmul.f32 %v426, %v429
    %v440 = vmul.f32 %v427, %v429
    %v442 = vperm.slane %v47, 0
    %v444 = vadd.f32 %v431, %v442
    %v445 = vadd.f32 %v432, %v442
    %v446 = vadd.f32 %v433, %v442
    %v447 = vadd.f32 %v434, %v442
    %v448 = vadd.f32 %v435, %v442
    %v449 = vadd.f32 %v436, %v442
    %v450 = vadd.f32 %v437, %v442
    %v451 = vadd.f32 %v438, %v442
    %v452 = vadd.f32 %v439, %v442
    %v453 = vadd.f32 %v440, %v442
    %v454 = vpack.c.bf16 %v444, %v444
    %v455 = vpack.c.bf16 %v445, %v445
    %v456 = vpack.c.bf16 %v446, %v446
    %v457 = vpack.c.bf16 %v447, %v447
    %v458 = vpack.c.bf16 %v448, %v448
    %v459 = vpack.c.bf16 %v449, %v449
    %v460 = vpack.c.bf16 %v450, %v450
    %v461 = vpack.c.bf16 %v451, %v451
    %v462 = vpack.c.bf16 %v452, %v452
    %v463 = vpack.c.bf16 %v453, %v453
    %vm464 = vcmask 257024
    %465 = vst.msk [vmem:[#allocation2] sm:$0xf] %vm464, %v454
    %466 = vst.msk [vmem:[#allocation2 + $0x4] sm:$0xf] %vm464, %v455
    %467 = vst.msk [vmem:[#allocation2 + $0x8] sm:$0xf] %vm464, %v456
    %468 = vst.msk [vmem:[#allocation2 + $0xc] sm:$0xf] %vm464, %v457
    %469 = vst.msk [vmem:[#allocation2 + $0x10] sm:$0xf] %vm464, %v458
    %470 = vst.msk [vmem:[#allocation2 + $0x14] sm:$0xf] %vm464, %v459
    %471 = vst.msk [vmem:[#allocation2 + $0x18] sm:$0xf] %vm464, %v460
    %472 = vst.msk [vmem:[#allocation2 + $0x1c] sm:$0xf] %vm464, %v461
    %473 = vst.msk [vmem:[#allocation2 + $0x20] sm:$0xf] %vm464, %v462
    %474 = vst.msk [vmem:[#allocation2 + $0x24] sm:$0xf] %vm464, %v463
  $region33: #{vdnet_prediction_head.3} parent=0 // pred_fallthru
    _
  %v475 = vld [vmem:[#allocation2] sm:$0xf]
  %v476 = vld [vmem:[#allocation2 + $0x4] sm:$0xf]
  %v477 = vld [vmem:[#allocation2 + $0x8] sm:$0xf]
  %v478 = vld [vmem:[#allocation2 + $0xc] sm:$0xf]
  %v479 = vld [vmem:[#allocation2 + $0x10] sm:$0xf]
  %v480 = vld [vmem:[#allocation2 + $0x14] sm:$0xf]
  %v481 = vld [vmem:[#allocation2 + $0x18] sm:$0xf]
  %v482 = vld [vmem:[#allocation2 + $0x1c] sm:$0xf]
  %v483 = vld [vmem:[#allocation2 + $0x20] sm:$0xf]
  %v484 = vld [vmem:[#allocation2 + $0x24] sm:$0xf]
  %v485 = vld [vmem:[%s5] sm:$0xf]
  %v486 = vld [vmem:[%s5 + $0x4] sm:$0xf]
  %v487 = vld [vmem:[%s5 + $0x8] sm:$0xf]
  %v488 = vld [vmem:[%s5 + $0xc] sm:$0xf]
  %v489 = vld [vmem:[%s6] sm:$0x1]
  %v491 = vperm.slane %v489, 0
  %v503 = vunpack.c.l.b16 %v475
  %v504 = vunpack.c.l.b16 %v476
  %v505 = vunpack.c.l.b16 %v477
  %v506 = vunpack.c.l.b16 %v478
  %v507 = vunpack.c.l.b16 %v479
  %v508 = vunpack.c.l.b16 %v480
  %v509 = vunpack.c.l.b16 %v481
  %v510 = vunpack.c.l.b16 %v482
  %v511 = vunpack.c.l.b16 %v483
  %v512 = vunpack.c.l.b16 %v484
  %v513 = vpack.c.b16 %v504, %v503
  %v514 = vpack.c.b16 %v506, %v505
  %v515 = vpack.c.b16 %v508, %v507
  %v516 = vpack.c.b16 %v510, %v509
  %v517 = vpack.c.b16 %v512, %v511
  %v522 = vunpack.c.l.b16 %v485
  %v523 = vunpack.c.l.b16 %v486
  %v524 = vunpack.c.l.b16 %v487
  %v525 = vunpack.c.l.b16 %v488
  %v526 = vpack.c.b16 %v523, %v522
  %v527 = vpack.c.b16 %v525, %v524
  %vm530 = vcmask 261120
  %v532 = vsel %vm530, %v513, 0
  %v535 = vsel %vm530, %v514, 0
  %v538 = vsel %vm530, %v515, 0
  %v541 = vsel %vm530, %v516, 0
  %v544 = vsel %vm530, %v517, 0
  %546 = vmatpush.bf16.msra.mxu0 0
  %547 = vmatpush.bf16.msra.mxu0 0
  %548 = vmatpush.bf16.msra.mxu0 0
  %549 = vmatpush.bf16.msra.mxu0 0
  %550 = vmatpush.bf16.msra.mxu0 0
  %551 = vmatpush.bf16.msra.mxu0 0
  %552 = vmatpush.bf16.msra.mxu0 %v527
  %553 = vmatpush.bf16.msra.mxu0 %v526
  %554 = vmatmul.bf16.gmra.mxu0 %v532
  %v555 = vpop.f32.mrf.mxu0
  %v556 = vadd.f32 %v491, %v555
  %v557 = vpop.f32.mrf.mxu0
  %v558 = vadd.f32 %v491, %v557
  %559 = vmatmul.bf16.gmra.mxu0 %v535
  %v560 = vpop.f32.mrf.mxu0
  %v561 = vadd.f32 %v491, %v560
  %v562 = vpop.f32.mrf.mxu0
  %v563 = vadd.f32 %v491, %v562
  %564 = vmatmul.bf16.gmra.mxu0 %v538
  %v565 = vpop.f32.mrf.mxu0
  %v566 = vadd.f32 %v491, %v565
  %v567 = vpop.f32.mrf.mxu0
  %v568 = vadd.f32 %v491, %v567
  %569 = vmatmul.bf16.gmra.mxu0 %v541
  %v570 = vpop.f32.mrf.mxu0
  %v571 = vadd.f32 %v491, %v570
  %v572 = vpop.f32.mrf.mxu0
  %v573 = vadd.f32 %v491, %v572
  %574 = vmatmul.bf16.gmra.mxu0 %v544
  %v575 = vpop.f32.mrf.mxu0
  %v576 = vadd.f32 %v491, %v575
  %v577 = vpop.f32.mrf.mxu0
  %v578 = vadd.f32 %v491, %v577
  %579 = vdwg.mxu0
  %vm580 = vcmask 130048
  %581 = vst.msk [vmem:[%s7] sm:$0xff] %vm580, %v556
  %582 = vst.msk [vmem:[%s7 + $0x8] sm:$0xff] %vm580, %v558
  %583 = vst.msk [vmem:[%s7 + $0x10] sm:$0xff] %vm580, %v561
  %584 = vst.msk [vmem:[%s7 + $0x18] sm:$0xff] %vm580, %v563
  %585 = vst.msk [vmem:[%s7 + $0x20] sm:$0xff] %vm580, %v566
  %586 = vst.msk [vmem:[%s7 + $0x28] sm:$0xff] %vm580, %v568
  %587 = vst.msk [vmem:[%s7 + $0x30] sm:$0xff] %vm580, %v571
  %588 = vst.msk [vmem:[%s7 + $0x38] sm:$0xff] %vm580, %v573
  %589 = vst.msk [vmem:[%s7 + $0x40] sm:$0xff] %vm580, %v576
  %590 = vst.msk [vmem:[%s7 + $0x48] sm:$0xff] %vm580, %v578
  // Predicated region
  $region34: #{vdnet_prediction_head.3} parent=0 // pred_check
    _
  $region35: #{vdnet_prediction_head.3} parent=0 // pred_check_branch
    %592 = sbr.rel (0) target = $region37
  $region36: #{vdnet_prediction_head.3} parent=0 // pred_region
    _
  $region37: #{vdnet_prediction_head.3} parent=0 // pred_fallthru
    _
  // Predicated region
  $region38: #{vdnet_prediction_head.3} parent=0 // pred_check
    _
  $region39: #{vdnet_prediction_head.3} parent=0 // pred_check_branch
    %594 = sbr.rel (0) target = $region41
  $region40: #{vdnet_prediction_head.3} parent=0 // pred_region
    _
  $region41: #{vdnet_prediction_head.3} parent=0 // pred_fallthru
    _

// kernel: vdnet_prediction_head.2
$region0: #{vdnet_prediction_head.2}
  #allocation0 [shape = 'u32[]', space=smem, size = 0x4, offset = 0x4, fixed_abs, tag = 'smem constant byte address 0x4 - core index']
  #allocation1 [shape = 'u32[72,128]{1,0:T(1,128)}', space=vmem, size = 0x9000, scoped, tag = 'internal scratch']
  #allocation2 [shape = 'bf16[8,32]{1,0:T(8,128)(2,1)}', space=vmem, size = 0x800, scoped, tag = 'scratch operand']
  %s0 = inlined_call_operand.vmem [shape: f32[2,45,32], index: 0, kind: input, shape index: {}]
  %s1 = inlined_call_operand.vmem [shape: bf16[32,32], index: 1, kind: input, shape index: {}]
  %s2 = inlined_call_operand.vmem [shape: f32[1,32], index: 2, kind: input, shape index: {}]
  %s3 = inlined_call_operand.vmem [shape: f32[1,32], index: 3, kind: input, shape index: {}]
  %s4 = inlined_call_operand.vmem [shape: f32[1,32], index: 4, kind: input, shape index: {}]
  %s5 = inlined_call_operand.vmem [shape: bf16[32,32], index: 5, kind: input, shape index: {}]
  %s6 = inlined_call_operand.vmem [shape: f32[1,32], index: 6, kind: input, shape index: {}]
  %s7 = inlined_call_operand.vmem [shape: bf16[32,32], index: 7, kind: input, shape index: {}]
  %s8 = inlined_call_operand.vmem [shape: f32[1,32], index: 8, kind: input, shape index: {}]
  %s9 = inlined_call_operand.vmem [shape: bf16[32,8], index: 9, kind: input, shape index: {}]
  %s10 = inlined_call_operand.vmem [shape: f32[1,8], index: 10, kind: input, shape index: {}]
  %s11 = inlined_call_operand.vmem [shape: bf16[32,64], index: 11, kind: input, shape index: {}]
  %s12 = inlined_call_operand.vmem [shape: f32[1,64], index: 12, kind: input, shape index: {}]
  %s13 = inlined_call_operand.hbm [shape: f32[2,8,64], index: 13, kind: output, shape index: {0}]
  %s14 = inlined_call_operand.hbm [shape: f32[2,8,8], index: 14, kind: output, shape index: {1}]
  %15 = xla_tuple %s13, %s14
  %s16 = sld [smem:[#allocation0]]
  $region97: #{vdnet_prediction_head.2} parent=0
    _
  %s18 = ssub.s32 1, %s16
  %s19 = scalar_select 0, %s18, %s16
  $region1: #{vdnet_prediction_head.2} parent=0
    #allocation3 [shape = 'u8[8192]{0}', space=vmem, size = 0x2000, scoped, tag = 'output window, operand 0']
    #allocation4 [shape = 's32[2]{0}', space=sflag, size = 0x8, scoped, tag = 'scoped memory for vdnet_prediction_head.2']
    #allocation5 [shape = 'u8[8192]{0}', space=vmem, size = 0x2000, scoped, tag = 'output window, operand 1']
    #allocation6 [shape = 's32[2]{0}', space=sflag, size = 0x8, scoped, tag = 'scoped memory for vdnet_prediction_head.2']
    %20 = vsyncpa [#allocation4], 0
    %s21 = scalar_lea.sflag [#allocation4], 1
    %22 = vsyncpa %s21, 0
    %23 = vsyncpa [#allocation6], 0
    %s24 = scalar_lea.sflag [#allocation6], 1
    %25 = vsyncpa %s24, 0
    loop: start=0, step=1, limit=4
    $region2: #{vdnet_prediction_head.2} parent=1 // loop_pre_header
      _
    $region3: #{vdnet_prediction_head.2} parent=1 // loop_header
      %s27 = sphi 0, %s31
      %p28 = scmp.ge.s32.totalorder %s27, 4
      %s34 = sphi 0, %s53
      %s35 = sphi 0, %s49
      %s36 = sphi 0, %s45
      %s37 = sphi 0, %s34
      %s38 = sphi 0, %s35
      %s39 = sphi 0, %s36
      %s40 = sphi 0, %s37
      %s41 = sphi 0, %s38
      %s42 = sphi 0, %s39
      %s58 = sphi 0, %s60
      %s61 = sphi 0, %s58
      %s62 = sphi 0, %s61
      %s78 = sphi 0, %s62
      %s82 = sphi 0, %s82
      %s84 = sphi 0, %s82
      %s85 = sphi 0, %s84
      %s99 = sphi 0, %s85
      %s103 = sphi 0, %s103
      %s105 = sphi 0, %s103
      %s106 = sphi 0, %s105
      %s120 = sphi 0, %s106
      %s124 = sphi 0, %s124
      %s126 = sphi 0, %s124
      %s127 = sphi 0, %s126
      %s141 = sphi 0, %s127
      %s145 = sphi 0, %s145
      %s147 = sphi 0, %s145
      %s148 = sphi 0, %s147
      %s162 = sphi 0, %s148
      %s166 = sphi 0, %s166
      %s168 = sphi 0, %s166
      %s169 = sphi 0, %s168
      %s183 = sphi 0, %s169
      %s187 = sphi 0, %s187
      %s189 = sphi 0, %s187
      %s190 = sphi 0, %s189
      %s204 = sphi 0, %s190
      %s208 = sphi 0, %s208
      %s210 = sphi 0, %s208
      %s211 = sphi 0, %s210
      %s225 = sphi 0, %s211
      %s229 = sphi 0, %s229
      %s231 = sphi 0, %s229
      %s232 = sphi 0, %s231
      %s246 = sphi 0, %s232
      %s250 = sphi 0, %s250
      %s252 = sphi 0, %s250
      %s253 = sphi 0, %s252
      %s267 = sphi 0, %s253
      %s271 = sphi 0, %s271
      %s273 = sphi 0, %s271
      %s274 = sphi 0, %s273
      %s288 = sphi 0, %s274
      %s294 = sphi 0, %s296
      %s297 = sphi 0, %s294
      %s298 = sphi 0, %s297
      %s314 = sphi 0, %s298
      %s320 = sphi 0, %s322
      %s323 = sphi 0, %s320
      %s324 = sphi 0, %s323
      %s340 = sphi 0, %s324
      %s350 = sphi 0, %s352
      %s353 = sphi 0, %s350
      %s354 = sphi 0, %s353
      %s370 = sphi 0, %s354
      %s378 = sphi 0, %s380
      %s381 = sphi 0, %s378
      %s382 = sphi 0, %s381
      %s398 = sphi 0, %s382
    $region4: #{vdnet_prediction_head.2} parent=1 // loop_header_branch
      %30 = sbr.rel (%p28) target = $region8
    $region5: #{vdnet_prediction_head.2} parent=1 // loop_body
      %s32 = ssub.s32 %s27, 1
      %s33 = ssub.s32 %s27, 2
      %s43 = sadd.s32 1, %s36
      %p44 = scmp.ge.s32.totalorder %s43, 1
      %s45 = scalar_select %p44, 0, %s43
      %s46 = sadd.s32 1, %s35
      %s47 = scalar_select %p44, %s46, %s35
      %p48 = scmp.ge.s32.totalorder %s47, 1
      %s49 = scalar_select %p48, 0, %s47
      %s50 = sadd.s32 1, %s34
      %s51 = scalar_select %p48, %s50, %s34
      %p52 = scmp.ge.s32.totalorder %s51, 2
      %s53 = scalar_select %p52, 0, %s51
      %s54 = ssub.s32 %s34, %s53
      %s55 = ssub.s32 %s35, %s49
      %s56 = sor.u32 %s54, %s55
      %p57 = scmp.eq.s32.totalorder %s56, 0
      %s59 = sadd.s32 %s58, 1
      %s60 = scalar_select %p57, %s58, %s59
      %p63 = pneg %p57
      %p64 = scmp.eq.s32.totalorder %s27, 1
      %p65 = por %p63, %p64
      %p66 = scmp.ne.s32.totalorder %s58, %s61
      %p67 = scmp.eq.s32.totalorder %s27, 0
      %p68 = por %p66, %p67
      %p69 = scmp.ne.s32.totalorder %s58, %s61
      %p70 = scmp.eq.s32.totalorder %s32, 1
      %p71 = por %p69, %p70
      %p72 = scmp.ne.s32.totalorder %s61, %s62
      %p73 = scmp.eq.s32.totalorder %s32, 0
      %p74 = por %p72, %p73
      %p75 = scmp.ne.s32.totalorder %s61, %s62
      %p76 = scmp.eq.s32.totalorder %s33, 1
      %p77 = por %p75, %p76
      %p79 = scmp.ne.s32.totalorder %s62, %s78
      %p80 = scmp.eq.s32.totalorder %s33, 0
      %p81 = por %p79, %p80
      %s83 = sadd.s32 %s82, 1
      %p86 = scmp.eq.s32.totalorder %s27, 1
      %p87 = scmp.ne.s32.totalorder %s82, %s84
      %p88 = scmp.eq.s32.totalorder %s27, 0
      %p89 = por %p87, %p88
      %p90 = scmp.ne.s32.totalorder %s82, %s84
      %p91 = scmp.eq.s32.totalorder %s32, 1
      %p92 = por %p90, %p91
      %p93 = scmp.ne.s32.totalorder %s84, %s85
      %p94 = scmp.eq.s32.totalorder %s32, 0
      %p95 = por %p93, %p94
      %p96 = scmp.ne.s32.totalorder %s84, %s85
      %p97 = scmp.eq.s32.totalorder %s33, 1
      %p98 = por %p96, %p97
      %p100 = scmp.ne.s32.totalorder %s85, %s99
      %p101 = scmp.eq.s32.totalorder %s33, 0
      %p102 = por %p100, %p101
      %s104 = sadd.s32 %s103, 1
      %p107 = scmp.eq.s32.totalorder %s27, 1
      %p108 = scmp.ne.s32.totalorder %s103, %s105
      %p109 = scmp.eq.s32.totalorder %s27, 0
      %p110 = por %p108, %p109
      %p111 = scmp.ne.s32.totalorder %s103, %s105
      %p112 = scmp.eq.s32.totalorder %s32, 1
      %p113 = por %p111, %p112
      %p114 = scmp.ne.s32.totalorder %s105, %s106
      %p115 = scmp.eq.s32.totalorder %s32, 0
      %p116 = por %p114, %p115
      %p117 = scmp.ne.s32.totalorder %s105, %s106
      %p118 = scmp.eq.s32.totalorder %s33, 1
      %p119 = por %p117, %p118
      %p121 = scmp.ne.s32.totalorder %s106, %s120
      %p122 = scmp.eq.s32.totalorder %s33, 0
      %p123 = por %p121, %p122
      %s125 = sadd.s32 %s124, 1
      %p128 = scmp.eq.s32.totalorder %s27, 1
      %p129 = scmp.ne.s32.totalorder %s124, %s126
      %p130 = scmp.eq.s32.totalorder %s27, 0
      %p131 = por %p129, %p130
      %p132 = scmp.ne.s32.totalorder %s124, %s126
      %p133 = scmp.eq.s32.totalorder %s32, 1
      %p134 = por %p132, %p133
      %p135 = scmp.ne.s32.totalorder %s126, %s127
      %p136 = scmp.eq.s32.totalorder %s32, 0
      %p137 = por %p135, %p136
      %p138 = scmp.ne.s32.totalorder %s126, %s127
      %p139 = scmp.eq.s32.totalorder %s33, 1
      %p140 = por %p138, %p139
      %p142 = scmp.ne.s32.totalorder %s127, %s141
      %p143 = scmp.eq.s32.totalorder %s33, 0
      %p144 = por %p142, %p143
      %s146 = sadd.s32 %s145, 1
      %p149 = scmp.eq.s32.totalorder %s27, 1
      %p150 = scmp.ne.s32.totalorder %s145, %s147
      %p151 = scmp.eq.s32.totalorder %s27, 0
      %p152 = por %p150, %p151
      %p153 = scmp.ne.s32.totalorder %s145, %s147
      %p154 = scmp.eq.s32.totalorder %s32, 1
      %p155 = por %p153, %p154
      %p156 = scmp.ne.s32.totalorder %s147, %s148
      %p157 = scmp.eq.s32.totalorder %s32, 0
      %p158 = por %p156, %p157
      %p159 = scmp.ne.s32.totalorder %s147, %s148
      %p160 = scmp.eq.s32.totalorder %s33, 1
      %p161 = por %p159, %p160
      %p163 = scmp.ne.s32.totalorder %s148, %s162
      %p164 = scmp.eq.s32.totalorder %s33, 0
      %p165 = por %p163, %p164
      %s167 = sadd.s32 %s166, 1
      %p170 = scmp.eq.s32.totalorder %s27, 1
      %p171 = scmp.ne.s32.totalorder %s166, %s168
      %p172 = scmp.eq.s32.totalorder %s27, 0
      %p173 = por %p171, %p172
      %p174 = scmp.ne.s32.totalorder %s166, %s168
      %p175 = scmp.eq.s32.totalorder %s32, 1
      %p176 = por %p174, %p175
      %p177 = scmp.ne.s32.totalorder %s168, %s169
      %p178 = scmp.eq.s32.totalorder %s32, 0
      %p179 = por %p177, %p178
      %p180 = scmp.ne.s32.totalorder %s168, %s169
      %p181 = scmp.eq.s32.totalorder %s33, 1
      %p182 = por %p180, %p181
      %p184 = scmp.ne.s32.totalorder %s169, %s183
      %p185 = scmp.eq.s32.totalorder %s33, 0
      %p186 = por %p184, %p185
      %s188 = sadd.s32 %s187, 1
      %p191 = scmp.eq.s32.totalorder %s27, 1
      %p192 = scmp.ne.s32.totalorder %s187, %s189
      %p193 = scmp.eq.s32.totalorder %s27, 0
      %p194 = por %p192, %p193
      %p195 = scmp.ne.s32.totalorder %s187, %s189
      %p196 = scmp.eq.s32.totalorder %s32, 1
      %p197 = por %p195, %p196
      %p198 = scmp.ne.s32.totalorder %s189, %s190
      %p199 = scmp.eq.s32.totalorder %s32, 0
      %p200 = por %p198, %p199
      %p201 = scmp.ne.s32.totalorder %s189, %s190
      %p202 = scmp.eq.s32.totalorder %s33, 1
      %p203 = por %p201, %p202
      %p205 = scmp.ne.s32.totalorder %s190, %s204
      %p206 = scmp.eq.s32.totalorder %s33, 0
      %p207 = por %p205, %p206
      %s209 = sadd.s32 %s208, 1
      %p212 = scmp.eq.s32.totalorder %s27, 1
      %p213 = scmp.ne.s32.totalorder %s208, %s210
      %p214 = scmp.eq.s32.totalorder %s27, 0
      %p215 = por %p213, %p214
      %p216 = scmp.ne.s32.totalorder %s208, %s210
      %p217 = scmp.eq.s32.totalorder %s32, 1
      %p218 = por %p216, %p217
      %p219 = scmp.ne.s32.totalorder %s210, %s211
      %p220 = scmp.eq.s32.totalorder %s32, 0
      %p221 = por %p219, %p220
      %p222 = scmp.ne.s32.totalorder %s210, %s211
      %p223 = scmp.eq.s32.totalorder %s33, 1
      %p224 = por %p222, %p223
      %p226 = scmp.ne.s32.totalorder %s211, %s225
      %p227 = scmp.eq.s32.totalorder %s33, 0
      %p228 = por %p226, %p227
      %s230 = sadd.s32 %s229, 1
      %p233 = scmp.eq.s32.totalorder %s27, 1
      %p234 = scmp.ne.s32.totalorder %s229, %s231
      %p235 = scmp.eq.s32.totalorder %s27, 0
      %p236 = por %p234, %p235
      %p237 = scmp.ne.s32.totalorder %s229, %s231
      %p238 = scmp.eq.s32.totalorder %s32, 1
      %p239 = por %p237, %p238
      %p240 = scmp.ne.s32.totalorder %s231, %s232
      %p241 = scmp.eq.s32.totalorder %s32, 0
      %p242 = por %p240, %p241
      %p243 = scmp.ne.s32.totalorder %s231, %s232
      %p244 = scmp.eq.s32.totalorder %s33, 1
      %p245 = por %p243, %p244
      %p247 = scmp.ne.s32.totalorder %s232, %s246
      %p248 = scmp.eq.s32.totalorder %s33, 0
      %p249 = por %p247, %p248
      %s251 = sadd.s32 %s250, 1
      %p254 = scmp.eq.s32.totalorder %s27, 1
      %p255 = scmp.ne.s32.totalorder %s250, %s252
      %p256 = scmp.eq.s32.totalorder %s27, 0
      %p257 = por %p255, %p256
      %p258 = scmp.ne.s32.totalorder %s250, %s252
      %p259 = scmp.eq.s32.totalorder %s32, 1
      %p260 = por %p258, %p259
      %p261 = scmp.ne.s32.totalorder %s252, %s253
      %p262 = scmp.eq.s32.totalorder %s32, 0
      %p263 = por %p261, %p262
      %p264 = scmp.ne.s32.totalorder %s252, %s253
      %p265 = scmp.eq.s32.totalorder %s33, 1
      %p266 = por %p264, %p265
      %p268 = scmp.ne.s32.totalorder %s253, %s267
      %p269 = scmp.eq.s32.totalorder %s33, 0
      %p270 = por %p268, %p269
      %s272 = sadd.s32 %s271, 1
      %p275 = scmp.eq.s32.totalorder %s27, 1
      %p276 = scmp.ne.s32.totalorder %s271, %s273
      %p277 = scmp.eq.s32.totalorder %s27, 0
      %p278 = por %p276, %p277
      %p279 = scmp.ne.s32.totalorder %s271, %s273
      %p280 = scmp.eq.s32.totalorder %s32, 1
      %p281 = por %p279, %p280
      %p282 = scmp.ne.s32.totalorder %s273, %s274
      %p283 = scmp.eq.s32.totalorder %s32, 0
      %p284 = por %p282, %p283
      %p285 = scmp.ne.s32.totalorder %s273, %s274
      %p286 = scmp.eq.s32.totalorder %s33, 1
      %p287 = por %p285, %p286
      %p289 = scmp.ne.s32.totalorder %s274, %s288
      %p290 = scmp.eq.s32.totalorder %s33, 0
      %p291 = por %p289, %p290
      %s292 = ssub.s32 %s36, %s45
      %p293 = scmp.eq.s32.totalorder %s292, 0
      %s295 = sadd.s32 %s294, 1
      %s296 = scalar_select %p293, %s294, %s295
      %p299 = pneg %p293
      %p300 = scmp.eq.s32.totalorder %s27, 1
      %p301 = por %p299, %p300
      %p302 = scmp.ne.s32.totalorder %s294, %s297
      %p303 = scmp.eq.s32.totalorder %s27, 0
      %p304 = por %p302, %p303
      %p305 = scmp.ne.s32.totalorder %s294, %s297
      %p306 = scmp.eq.s32.totalorder %s32, 1
      %p307 = por %p305, %p306
      %p308 = scmp.ne.s32.totalorder %s297, %s298
      %p309 = scmp.eq.s32.totalorder %s32, 0
      %p310 = por %p308, %p309
      %p311 = scmp.ne.s32.totalorder %s297, %s298
      %p312 = scmp.eq.s32.totalorder %s33, 1
      %p313 = por %p311, %p312
      %p315 = scmp.ne.s32.totalorder %s298, %s314
      %p316 = scmp.eq.s32.totalorder %s33, 0
      %p317 = por %p315, %p316
      %s318 = ssub.s32 %s36, %s45
      %p319 = scmp.eq.s32.totalorder %s318, 0
      %s321 = sadd.s32 %s320, 1
      %s322 = scalar_select %p319, %s320, %s321
      %p325 = pneg %p319
      %p326 = scmp.eq.s32.totalorder %s27, 1
      %p327 = por %p325, %p326
      %p328 = scmp.ne.s32.totalorder %s320, %s323
      %p329 = scmp.eq.s32.totalorder %s27, 0
      %p330 = por %p328, %p329
      %p331 = scmp.ne.s32.totalorder %s320, %s323
      %p332 = scmp.eq.s32.totalorder %s32, 1
      %p333 = por %p331, %p332
      %p334 = scmp.ne.s32.totalorder %s323, %s324
      %p335 = scmp.eq.s32.totalorder %s32, 0
      %p336 = por %p334, %p335
      %p337 = scmp.ne.s32.totalorder %s323, %s324
      %p338 = scmp.eq.s32.totalorder %s33, 1
      %p339 = por %p337, %p338
      %p341 = scmp.ne.s32.totalorder %s324, %s340
      %p342 = scmp.eq.s32.totalorder %s33, 0
      %p343 = por %p341, %p342
      %s344 = ssub.s32 %s34, %s53
      %s345 = ssub.s32 %s35, %s49
      %s346 = sor.u32 %s344, %s345
      %s347 = ssub.s32 %s36, %s45
      %s348 = sor.u32 %s346, %s347
      %p349 = scmp.eq.s32.totalorder %s348, 0
      %s351 = sadd.s32 %s350, 1
      %s352 = scalar_select %p349, %s350, %s351
      %p355 = pneg %p349
      %p356 = scmp.eq.s32.totalorder %s27, 1
      %p357 = por %p355, %p356
      %p358 = scmp.ne.s32.totalorder %s350, %s353
      %p359 = scmp.eq.s32.totalorder %s27, 0
      %p360 = por %p358, %p359
      %p361 = scmp.ne.s32.totalorder %s350, %s353
      %p362 = scmp.eq.s32.totalorder %s32, 1
      %p363 = por %p361, %p362
      %p364 = scmp.ne.s32.totalorder %s353, %s354
      %p365 = scmp.eq.s32.totalorder %s32, 0
      %p366 = por %p364, %p365
      %p367 = scmp.ne.s32.totalorder %s353, %s354
      %p368 = scmp.eq.s32.totalorder %s33, 1
      %p369 = por %p367, %p368
      %p371 = scmp.ne.s32.totalorder %s354, %s370
      %p372 = scmp.eq.s32.totalorder %s33, 0
      %p373 = por %p371, %p372
      %s374 = ssub.s32 %s34, %s53
      %s375 = ssub.s32 %s35, %s49
      %s376 = sor.u32 %s374, %s375
      %p377 = scmp.eq.s32.totalorder %s376, 0
      %s379 = sadd.s32 %s378, 1
      %s380 = scalar_select %p377, %s378, %s379
      %p383 = pneg %p377
      %p384 = scmp.eq.s32.totalorder %s27, 1
      %p385 = por %p383, %p384
      %p386 = scmp.ne.s32.totalorder %s378, %s381
      %p387 = scmp.eq.s32.totalorder %s27, 0
      %p388 = por %p386, %p387
      %p389 = scmp.ne.s32.totalorder %s378, %s381
      %p390 = scmp.eq.s32.totalorder %s32, 1
      %p391 = por %p389, %p390
      %p392 = scmp.ne.s32.totalorder %s381, %s382
      %p393 = scmp.eq.s32.totalorder %s32, 0
      %p394 = por %p392, %p393
      %p395 = scmp.ne.s32.totalorder %s381, %s382
      %p396 = scmp.eq.s32.totalorder %s33, 1
      %p397 = por %p395, %p396
      %p399 = scmp.ne.s32.totalorder %s382, %s398
      %p400 = scmp.eq.s32.totalorder %s33, 0
      %p401 = por %p399, %p400
      %p402 = scmp.le.s32.totalorder 1, %s27
      %p403 = scmp.lt.s32.totalorder %s27, 3
      %p404 = pnand %p402, %p403
      %p405 = pneg %p404
      // Predicated region
      $region9: #{vdnet_prediction_head.2} parent=5 // pred_check
        _
      $region10: #{vdnet_prediction_head.2} parent=5 // pred_check_branch
        %407 = sbr.rel (%p404) target = $region12
      $region11: #{vdnet_prediction_head.2} parent=5 // pred_region
        %s408 = ssub.s32 %s27, 1
        // Predicated region
        $region13: #{vdnet_prediction_head.2} parent=11 // pred_check
          %p409 = pneg %p95
        $region14: #{vdnet_prediction_head.2} parent=11 // pred_check_branch
          %411 = sbr.rel (%p409) target = $region16
        $region15: #{vdnet_prediction_head.2} parent=11 // pred_region
          _
        $region16: #{vdnet_prediction_head.2} parent=11 // pred_fallthru
          _
        // Predicated region
        $region17: #{vdnet_prediction_head.2} parent=11 // pred_check
          %p412 = pneg %p116
        $region18: #{vdnet_prediction_head.2} parent=11 // pred_check_branch
          %414 = sbr.rel (%p412) target = $region20
        $region19: #{vdnet_prediction_head.2} parent=11 // pred_region
          _
        $region20: #{vdnet_prediction_head.2} parent=11 // pred_fallthru
          _
        // Predicated region
        $region21: #{vdnet_prediction_head.2} parent=11 // pred_check
          %p415 = pneg %p137
        $region22: #{vdnet_prediction_head.2} parent=11 // pred_check_branch
          %417 = sbr.rel (%p415) target = $region24
        $region23: #{vdnet_prediction_head.2} parent=11 // pred_region
          _
        $region24: #{vdnet_prediction_head.2} parent=11 // pred_fallthru
          _
        // Predicated region
        $region25: #{vdnet_prediction_head.2} parent=11 // pred_check
          %p418 = pneg %p158
        $region26: #{vdnet_prediction_head.2} parent=11 // pred_check_branch
          %420 = sbr.rel (%p418) target = $region28
        $region27: #{vdnet_prediction_head.2} parent=11 // pred_region
          _
        $region28: #{vdnet_prediction_head.2} parent=11 // pred_fallthru
          _
        // Predicated region
        $region29: #{vdnet_prediction_head.2} parent=11 // pred_check
          %p421 = pneg %p179
        $region30: #{vdnet_prediction_head.2} parent=11 // pred_check_branch
          %423 = sbr.rel (%p421) target = $region32
        $region31: #{vdnet_prediction_head.2} parent=11 // pred_region
          _
        $region32: #{vdnet_prediction_head.2} parent=11 // pred_fallthru
          _
        // Predicated region
        $region33: #{vdnet_prediction_head.2} parent=11 // pred_check
          %p424 = pneg %p200
        $region34: #{vdnet_prediction_head.2} parent=11 // pred_check_branch
          %426 = sbr.rel (%p424) target = $region36
        $region35: #{vdnet_prediction_head.2} parent=11 // pred_region
          _
        $region36: #{vdnet_prediction_head.2} parent=11 // pred_fallthru
          _
        // Predicated region
        $region37: #{vdnet_prediction_head.2} parent=11 // pred_check
          %p427 = pneg %p221
        $region38: #{vdnet_prediction_head.2} parent=11 // pred_check_branch
          %429 = sbr.rel (%p427) target = $region40
        $region39: #{vdnet_prediction_head.2} parent=11 // pred_region
          _
        $region40: #{vdnet_prediction_head.2} parent=11 // pred_fallthru
          _
        // Predicated region
        $region41: #{vdnet_prediction_head.2} parent=11 // pred_check
          %p430 = pneg %p242
        $region42: #{vdnet_prediction_head.2} parent=11 // pred_check_branch
          %432 = sbr.rel (%p430) target = $region44
        $region43: #{vdnet_prediction_head.2} parent=11 // pred_region
          _
        $region44: #{vdnet_prediction_head.2} parent=11 // pred_fallthru
          _
        // Predicated region
        $region45: #{vdnet_prediction_head.2} parent=11 // pred_check
          %p433 = pneg %p263
        $region46: #{vdnet_prediction_head.2} parent=11 // pred_check_branch
          %435 = sbr.rel (%p433) target = $region48
        $region47: #{vdnet_prediction_head.2} parent=11 // pred_region
          _
        $region48: #{vdnet_prediction_head.2} parent=11 // pred_fallthru
          _
        // Predicated region
        $region49: #{vdnet_prediction_head.2} parent=11 // pred_check
          %p436 = pneg %p284
        $region50: #{vdnet_prediction_head.2} parent=11 // pred_check_branch
          %438 = sbr.rel (%p436) target = $region52
        $region51: #{vdnet_prediction_head.2} parent=11 // pred_region
          _
        $region52: #{vdnet_prediction_head.2} parent=11 // pred_fallthru
          _
        // Predicated region
        $region53: #{vdnet_prediction_head.2} parent=11 // pred_check
          %p439 = pneg %p310
        $region54: #{vdnet_prediction_head.2} parent=11 // pred_check_branch
          %441 = sbr.rel (%p439) target = $region56
        $region55: #{vdnet_prediction_head.2} parent=11 // pred_region
          %p442 = scmp.lt.s32.totalorder %s39, 0
          %s443 = scalar_select %p442, %s39, 0
          %s444 = smul.addr %s443, 4
          %s445 = scalar_lea.vmem %s11, %s444
        $region56: #{vdnet_prediction_head.2} parent=11 // pred_fallthru
          _
        // Predicated region
        $region57: #{vdnet_prediction_head.2} parent=11 // pred_check
          %p446 = pneg %p336
        $region58: #{vdnet_prediction_head.2} parent=11 // pred_check_branch
          %448 = sbr.rel (%p446) target = $region60
        $region59: #{vdnet_prediction_head.2} parent=11 // pred_region
          %p449 = scmp.lt.s32.totalorder %s39, 0
          %s450 = scalar_select %p449, %s39, 0
          %s451 = scalar_lea.vmem %s12, %s450
        $region60: #{vdnet_prediction_head.2} parent=11 // pred_fallthru
          _
      $region12: #{vdnet_prediction_head.2} parent=5 // pred_fallthru
        _
      %p452 = scmp.lt.s32.totalorder %s27, 2
      // Predicated region
      $region61: #{vdnet_prediction_head.2} parent=5 // pred_check
        %p453 = pneg %p452
      $region62: #{vdnet_prediction_head.2} parent=5 // pred_check_branch
        %455 = sbr.rel (%p453) target = $region64
      $region63: #{vdnet_prediction_head.2} parent=5 // pred_region
        // Predicated region
        $region65: #{vdnet_prediction_head.2} parent=63 // pred_check
          %p456 = pneg %p68
        $region66: #{vdnet_prediction_head.2} parent=63 // pred_check_branch
          %458 = sbr.rel (%p456) target = $region68
        $region67: #{vdnet_prediction_head.2} parent=63 // pred_region
          %p459 = scmp.lt.s32.totalorder %s34, 1
          %s460 = scalar_select %p459, %s34, 1
          %p461 = scmp.lt.s32.totalorder %s35, 5
          %s462 = scalar_select %p461, %s35, 5
          %s463 = smul.addr %s460, 6
          %s464 = sadd.s32 %s462, %s463
          %s465 = smul.addr %s464, 8
          %s466 = scalar_lea.vmem %s0, %s465
        $region68: #{vdnet_prediction_head.2} parent=63 // pred_fallthru
          _
      $region64: #{vdnet_prediction_head.2} parent=5 // pred_fallthru
        _
      %p467 = scmp.le.s32.totalorder 1, %s27
      %p468 = scmp.lt.s32.totalorder %s27, 3
      %p469 = pnand %p467, %p468
      %p470 = pneg %p469
      // Predicated region
      $region69: #{vdnet_prediction_head.2} parent=5 // pred_check
        _
      $region70: #{vdnet_prediction_head.2} parent=5 // pred_check_branch
        %472 = sbr.rel (%p469) target = $region72
      $region71: #{vdnet_prediction_head.2} parent=5 // pred_region
        %s473 = ssub.s32 %s27, 1
        %p474 = scmp.lt.s32.totalorder %s37, 1
        %s475 = scalar_select %p474, %s37, 1
        %p476 = scmp.lt.s32.totalorder %s38, 5
        %s477 = scalar_select %p476, %s38, 5
        %s478 = smul.addr %s475, 6
        %s479 = sadd.s32 %s477, %s478
        %s480 = smul.addr %s479, 8
        %s481 = scalar_lea.vmem %s0, %s480
        %p482 = pneg %p74
        %p483 = pneg %p71
        %p484 = pneg %p95
        %p485 = pneg %p92
        %p486 = pneg %p116
        %p487 = pneg %p113
        %p488 = pneg %p137
        %p489 = pneg %p134
        %p490 = pneg %p158
        %p491 = pneg %p155
        %p492 = pneg %p179
        %p493 = pneg %p176
        %p494 = pneg %p200
        %p495 = pneg %p197
        %p496 = pneg %p221
        %p497 = pneg %p218
        %p498 = pneg %p242
        %p499 = pneg %p239
        %p500 = pneg %p263
        %p501 = pneg %p260
        %p502 = pneg %p284
        %p503 = pneg %p281
        %p504 = scmp.lt.s32.totalorder %s39, 0
        %s505 = scalar_select %p504, %s39, 0
        %s506 = smul.addr %s505, 4
        %s507 = scalar_lea.vmem %s11, %s506
        %p508 = pneg %p310
        %p509 = pneg %p307
        %p510 = scmp.lt.s32.totalorder %s39, 0
        %s511 = scalar_select %p510, %s39, 0
        %s512 = scalar_lea.vmem %s12, %s511
        %p513 = pneg %p336
        %p514 = pneg %p333
        %p515 = pneg %p366
        %p516 = pneg %p363
        %s517 = sand.u32 %s353, 1
        %s518 = scalar_lea.sflag [#allocation4], %s517
        %s519 = sand.u32 %s353, 1
        %s520 = smul.addr %s519, 8
        %s521 = scalar_lea.vmem [#allocation3], %s520
        %p522 = pneg %p394
        %p523 = pneg %p391
        %s524 = sand.u32 %s381, 1
        %s525 = scalar_lea.sflag [#allocation6], %s524
        %s526 = sand.u32 %s381, 1
        %s527 = smul.addr %s526, 8
        %s528 = scalar_lea.vmem [#allocation5], %s527
        %p529 = scmp.lt.s32.totalorder %s37, 1
        %s530 = scalar_select %p529, %s37, 1
        %p531 = scmp.lt.s32.totalorder %s38, 5
        %s532 = scalar_select %p531, %s38, 5
        %s533 = smul.addr %s530, 6
        %s534 = sadd.s32 %s532, %s533
        %s535 = smul.addr %s534, 8
        %s536 = scalar_lea.vmem %s0, %s535
        %p537 = scmp.lt.s32.totalorder %s39, 0
        %s538 = scalar_select %p537, %s39, 0
        %s539 = smul.addr %s538, 4
        %s540 = scalar_lea.vmem %s11, %s539
        %p541 = scmp.lt.s32.totalorder %s39, 0
        %s542 = scalar_select %p541, %s39, 0
        %s543 = scalar_lea.vmem %s12, %s542
        %p545 = scmp.eq.s32.totalorder %s39, 0
        // Predicated region
        $region73: #{vdnet_prediction_head.2} parent=71 // pred_check
          %p546 = pneg %p545
        $region74: #{vdnet_prediction_head.2} parent=71 // pred_check_branch
          %548 = sbr.rel (%p546) target = $region76
        $region75: #{vdnet_prediction_head.2} parent=71 // pred_region
          %v549 = vld [vmem:[%s536] sm:$0xff]
          %v550 = vld [vmem:[%s1] sm:$0xf]
          %v551 = vld [vmem:[%s1 + $0x4] sm:$0xf]
          %v552 = vld [vmem:[%s1 + $0x8] sm:$0xf]
          %v553 = vld [vmem:[%s1 + $0xc] sm:$0xf]
          %v554 = vld [vmem:[%s2] sm:$0x1]
          %v555 = vld [vmem:[%s3] sm:$0x1]
          %v556 = vld [vmem:[%s4] sm:$0x1]
          %v557 = vpack.c.bf16 %v549, %v549
          %v559 = vperm.slane %v554, 0
          %v565 = vunpack.c.l.b16 %v550
          %v566 = vunpack.c.l.b16 %v551
          %v567 = vunpack.c.l.b16 %v552
          %v568 = vunpack.c.l.b16 %v553
          %v569 = vpack.c.b16 %v566, %v565
          %v570 = vpack.c.b16 %v568, %v567
          %vm573 = vcmask 261120
          %v575 = vsel %vm573, %v557, 0
          %577 = vmatpush.bf16.msra.mxu0 0
          %578 = vmatpush.bf16.msra.mxu0 0
          %579 = vmatpush.bf16.msra.mxu0 0
          %580 = vmatpush.bf16.msra.mxu0 0
          %581 = vmatpush.bf16.msra.mxu0 0
          %582 = vmatpush.bf16.msra.mxu0 0
          %583 = vmatpush.bf16.msra.mxu0 %v570
          %584 = vmatpush.bf16.msra.mxu0 %v569
          %585 = vmatmul.bf16.gmra.mxu0 %v575
          %v586 = vpop.f32.mrf.mxu0
          %v587 = vadd.f32 %v559, %v586
          %v588 = vpop.f32.mrf.mxu0
          %589 = vdwg.mxu0
          %v590 = vmul.f32 %v587, 0.5
          %v591 = vmul.f32 %v587, 0.044715
          %v592 = vmul.f32 %v591, %v587
          %v593 = vmul.f32 %v592, %v587
          %v594 = vadd.f32 %v587, %v593
          %v595 = vmul.f32 %v594, 0.7978846
          %v596 = vtanh.pop %v595
          %v597 = vadd.f32 %v596, 1.0
          %v598 = vmul.f32 %v590, %v597
          %v599 = vsel %vm573, %v598, 0.0
          %600 = vadd.xlane.f32.xlu0 %v599
          %v601 = vpop.xlane.xlu0 %600
          %v602 = vmul.f32 %v601, 0.03125
          %v603 = vsub.f32 %v598, %v602
          %v604 = vmul.f32 %v603, %v603
          %v605 = vsel %vm573, %v604, 0.0
          %606 = vadd.xlane.f32.xlu0 %v605
          %v607 = vpop.xlane.xlu0 %606
          %v608 = vmul.f32 %v607, 0.03125
          %v609 = vadd.f32 %v608, 1e-12
          %v610 = vrsqrt.pop %v609
          %v611 = vmul.f32 %v610, %v609
          %v612 = vmul.f32 %v611, %v610
          %v613 = vmul.f32 0.5, %v612
          %v614 = vsub.f32 1.5, %v613
          %v615 = vmul.f32 %v610, %v614
          %vm616 = vweird.f32 %v609
          %vm617 = vweird.f32 %v610
          %vm618 = vmor %vm616, %vm617
          %v619 = vsel %vm618, %v610, %v615
          %v620 = vmul.f32 %v603, %v619
          %v622 = vperm.slane %v555, 0
          %v624 = vmul.f32 %v620, %v622
          %v626 = vperm.slane %v556, 0
          %v628 = vadd.f32 %v624, %v626
          %v629 = vpack.c.bf16 %v628, %v628
          %v630 = vld [vmem:[%s5] sm:$0xf]
          %v631 = vld [vmem:[%s5 + $0x4] sm:$0xf]
          %v632 = vld [vmem:[%s5 + $0x8] sm:$0xf]
          %v633 = vld [vmem:[%s5 + $0xc] sm:$0xf]
          %v634 = vld [vmem:[%s6] sm:$0x1]
          %v636 = vperm.slane %v634, 0
          %v642 = vunpack.c.l.b16 %v630
          %v643 = vunpack.c.l.b16 %v631
          %v644 = vunpack.c.l.b16 %v632
          %v645 = vunpack.c.l.b16 %v633
          %v646 = vpack.c.b16 %v643, %v642
          %v647 = vpack.c.b16 %v645, %v644
          %v651 = vsel %vm573, %v629, 0
          %653 = vmatpush.bf16.msra.mxu0 0
          %654 = vmatpush.bf16.msra.mxu0 0
          %655 = vmatpush.bf16.msra.mxu0 0
          %656 = vmatpush.bf16.msra.mxu0 0
          %657 = vmatpush.bf16.msra.mxu0 0
          %658 = vmatpush.bf16.msra.mxu0 0
          %659 = vmatpush.bf16.msra.mxu0 %v647
          %660 = vmatpush.bf16.msra.mxu0 %v646
          %661 = vmatmul.bf16.gmra.mxu0 %v651
          %v662 = vpop.f32.mrf.mxu0
          %v663 = vadd.f32 %v636, %v662
          %v664 = vpop.f32.mrf.mxu0
          %665 = vdwg.mxu0
          %v666 = vpack.c.bf16 %v663, %v663
          %vm667 = vcmask 257024
          %668 = vst.msk [vmem:[#allocation2] sm:$0xf] %vm667, %v666
          %v669 = vld [vmem:[%s7] sm:$0xf]
          %v670 = vld [vmem:[%s7 + $0x4] sm:$0xf]
          %v671 = vld [vmem:[%s7 + $0x8] sm:$0xf]
          %v672 = vld [vmem:[%s7 + $0xc] sm:$0xf]
          %v673 = vld [vmem:[%s8] sm:$0x1]
          %v675 = vperm.slane %v673, 0
          %v681 = vunpack.c.l.b16 %v669
          %v682 = vunpack.c.l.b16 %v670
          %v683 = vunpack.c.l.b16 %v671
          %v684 = vunpack.c.l.b16 %v672
          %v685 = vpack.c.b16 %v682, %v681
          %v686 = vpack.c.b16 %v684, %v683
          %v690 = vsel %vm573, %v666, 0
          %692 = vmatpush.bf16.msra.mxu0 0
          %693 = vmatpush.bf16.msra.mxu0 0
          %694 = vmatpush.bf16.msra.mxu0 0
          %695 = vmatpush.bf16.msra.mxu0 0
          %696 = vmatpush.bf16.msra.mxu0 0
          %697 = vmatpush.bf16.msra.mxu0 0
          %698 = vmatpush.bf16.msra.mxu0 %v686
          %699 = vmatpush.bf16.msra.mxu0 %v685
          %700 = vmatmul.bf16.gmra.mxu0 %v690
          %v701 = vpop.f32.mrf.mxu0
          %v702 = vadd.f32 %v675, %v701
          %v703 = vpop.f32.mrf.mxu0
          %704 = vdwg.mxu0
          %v705 = vpack.c.bf16 %v702, %v702
          %v706 = vld [vmem:[%s9] sm:$0xf]
          %v707 = vld [vmem:[%s9 + $0x4] sm:$0xf]
          %v708 = vld [vmem:[%s9 + $0x8] sm:$0xf]
          %v709 = vld [vmem:[%s9 + $0xc] sm:$0xf]
          %v710 = vld [vmem:[%s10] sm:$0x1]
          %v712 = vperm.slane %v710, 0
          %v718 = vunpack.c.l.b16 %v706
          %v719 = vunpack.c.l.b16 %v707
          %v720 = vunpack.c.l.b16 %v708
          %v721 = vunpack.c.l.b16 %v709
          %v722 = vpack.c.b16 %v719, %v718
          %v723 = vpack.c.b16 %v721, %v720
          %v727 = vsel %vm573, %v705, 0
          %729 = vmatpush.bf16.msra.mxu0 0
          %730 = vmatpush.bf16.msra.mxu0 0
          %731 = vmatpush.bf16.msra.mxu0 0
          %732 = vmatpush.bf16.msra.mxu0 0
          %733 = vmatpush.bf16.msra.mxu0 0
          %734 = vmatpush.bf16.msra.mxu0 0
          %735 = vmatpush.bf16.msra.mxu0 %v723
          %736 = vmatpush.bf16.msra.mxu0 %v722
          %737 = vmatmul.bf16.gmra.mxu0 %v727
          %v738 = vpop.f32.mrf.mxu0
          %v739 = vadd.f32 %v712, %v738
          %v740 = vpop.f32.mrf.mxu0
          %741 = vdwg.mxu0
          %vm742 = vcmask 64512
          %743 = vst.msk [vmem:[%s528] sm:$0xff] %vm742, %v739
        $region76: #{vdnet_prediction_head.2} parent=71 // pred_fallthru
          _
        %v744 = vld [vmem:[#allocation2] sm:$0xf]
        %v745 = vld [vmem:[%s540] sm:$0xf]
        %v746 = vld [vmem:[%s540 + $0x4] sm:$0xf]
        %v747 = vld [vmem:[%s540 + $0x8] sm:$0xf]
        %v748 = vld [vmem:[%s540 + $0xc] sm:$0xf]
        %v749 = vld [vmem:[%s543] sm:$0x1]
        %v751 = vperm.slane %v749, 0
        %v757 = vunpack.c.l.b16 %v745
        %v758 = vunpack.c.l.b16 %v746
        %v759 = vunpack.c.l.b16 %v747
        %v760 = vunpack.c.l.b16 %v748
        %v761 = vpack.c.b16 %v758, %v757
        %v762 = vpack.c.b16 %v760, %v759
        %vm765 = vcmask 261120
        %v767 = vsel %vm765, %v744, 0
        %769 = vmatpush.bf16.msra.mxu0 0
        %770 = vmatpush.bf16.msra.mxu0 0
        %771 = vmatpush.bf16.msra.mxu0 0
        %772 = vmatpush.bf16.msra.mxu0 0
        %773 = vmatpush.bf16.msra.mxu0 0
        %774 = vmatpush.bf16.msra.mxu0 0
        %775 = vmatpush.bf16.msra.mxu0 %v762
        %776 = vmatpush.bf16.msra.mxu0 %v761
        %777 = vmatmul.bf16.gmra.mxu0 %v767
        %v778 = vpop.f32.mrf.mxu0
        %v779 = vadd.f32 %v751, %v778
        %v780 = vpop.f32.mrf.mxu0
        %781 = vdwg.mxu0
        %vm782 = vcmask 523264
        %783 = vst.msk [vmem:[%s521] sm:$0xff] %vm782, %v779
        %s784 = sand.u32 %s353, 1
        %s785 = scalar_lea.sflag [#allocation4], %s784
        %s786 = sand.u32 %s353, 1
        %s787 = smul.addr %s786, 8
        %s788 = scalar_lea.vmem [#allocation3], %s787
        %s789 = sand.u32 %s381, 1
        %s790 = scalar_lea.sflag [#allocation6], %s789
        %s791 = sand.u32 %s381, 1
        %s792 = smul.addr %s791, 8
        %s793 = scalar_lea.vmem [#allocation5], %s792
        // Predicated region
        $region77: #{vdnet_prediction_head.2} parent=71 // pred_check
          %p794 = pneg %p363
        $region78: #{vdnet_prediction_head.2} parent=71 // pred_check_branch
          %796 = sbr.rel (%p794) target = $region80
        $region79: #{vdnet_prediction_head.2} parent=71 // pred_region
          %798 = vsyncadd %s785, 0
          %s799 = sadd.s32 %s39, %s38
          %s800 = sadd.s32 %s799, %s37
          %s801 = smul.addr %s800, 8
          %s802 = scalar_lea.hbm %s13, %s801
          %s804 = sshll.u32 %s788, 4
          %s805 = int_to_ptr.vmem [resolvable:$true] %s804
          %s806 = sshll.u32 %s802, 4
          %s807 = int_to_ptr.hbm [resolvable:$true] %s806
          %809 = dma.vmem_to_hbm [thread:$0]  %s805, 128, %s807, %s785
        $region80: #{vdnet_prediction_head.2} parent=71 // pred_fallthru
          _
        // Predicated region
        $region81: #{vdnet_prediction_head.2} parent=71 // pred_check
          %p810 = pneg %p391
        $region82: #{vdnet_prediction_head.2} parent=71 // pred_check_branch
          %812 = sbr.rel (%p810) target = $region84
        $region83: #{vdnet_prediction_head.2} parent=71 // pred_region
          %814 = vsyncadd %s790, 0
          %s815 = sadd.s32 %s38, %s37
          %s816 = smul.addr %s815, 8
          %s817 = scalar_lea.hbm %s14, %s816
          %s819 = sshll.u32 %s793, 4
          %s820 = int_to_ptr.vmem [resolvable:$true] %s819
          %s821 = sshll.u32 %s817, 4
          %s822 = int_to_ptr.hbm [resolvable:$true] %s821
          %824 = dma.vmem_to_hbm [thread:$0]  %s820, 128, %s822, %s790
        $region84: #{vdnet_prediction_head.2} parent=71 // pred_fallthru
          _
      $region72: #{vdnet_prediction_head.2} parent=5 // pred_fallthru
        _
      %p825 = scmp.le.s32.totalorder 2, %s27
      // Predicated region
      $region85: #{vdnet_prediction_head.2} parent=5 // pred_check
        %p826 = pneg %p825
      $region86: #{vdnet_prediction_head.2} parent=5 // pred_check_branch
        %828 = sbr.rel (%p826) target = $region88
      $region87: #{vdnet_prediction_head.2} parent=5 // pred_region
        %s829 = ssub.s32 %s27, 2
        // Predicated region
        $region89: #{vdnet_prediction_head.2} parent=87 // pred_check
          %p830 = pneg %p369
        $region90: #{vdnet_prediction_head.2} parent=87 // pred_check_branch
          %832 = sbr.rel (%p830) target = $region92
        $region91: #{vdnet_prediction_head.2} parent=87 // pred_region
          %s833 = sand.u32 %s354, 1
          %s834 = scalar_lea.sflag [#allocation4], %s833
          %s835 = sand.u32 %s354, 1
          %s836 = smul.addr %s835, 8
          %s837 = scalar_lea.vmem [#allocation3], %s836
          %839 = dma.done %s834, 128
        $region92: #{vdnet_prediction_head.2} parent=87 // pred_fallthru
          _
        // Predicated region
        $region93: #{vdnet_prediction_head.2} parent=87 // pred_check
          %p840 = pneg %p397
        $region94: #{vdnet_prediction_head.2} parent=87 // pred_check_branch
          %842 = sbr.rel (%p840) target = $region96
        $region95: #{vdnet_prediction_head.2} parent=87 // pred_region
          %s843 = sand.u32 %s382, 1
          %s844 = scalar_lea.sflag [#allocation6], %s843
          %s845 = sand.u32 %s382, 1
          %s846 = smul.addr %s845, 8
          %s847 = scalar_lea.vmem [#allocation5], %s846
          %849 = dma.done %s844, 128
        $region96: #{vdnet_prediction_head.2} parent=87 // pred_fallthru
          _
      $region88: #{vdnet_prediction_head.2} parent=5 // pred_fallthru
        _
    $region6: #{vdnet_prediction_head.2} parent=1 // loop_footer
      %s31 = sadd.s32 1, %s27
    $region7: #{vdnet_prediction_head.2} parent=1 // loop_footer_branch
      %26 = sbr.rel target = $region3
    $region8: #{vdnet_prediction_head.2} parent=1 // loop_exit
      _
    %850 = vsyncpa [#allocation4], 1
    %s851 = scalar_lea.sflag [#allocation4], 1
    %852 = vsyncpa %s851, 1
    %853 = vsyncpa [#allocation6], 1
    %s854 = scalar_lea.sflag [#allocation6], 1
    %855 = vsyncpa %s854, 1

</llo_original>
